<compile_context>
chip_gen: v7x
topology: tpu7x:2x2x1
jax: 0.10.0
libtpu: 0.0.40
codegen_flags: <defaults>
</compile_context>

<pallas_src>
import functools

import jax
import jax.numpy as jnp
from jax import lax
from jax.experimental import pallas as pl
from jax.experimental.pallas import tpu as pltpu

N_PAD = 128  # lane-dense staging width for the (B, n_class) logits


def cnn_kernel(ids_ref, fw_ref, bconv_ref, wout_ref, bout_ref, o_ref, *,
               dim, kh, c_out):
    """One batch tile: fused embedding-gather+conv matmul + max-pool + linear.

    ids_ref   : (TB, dim+4) int32  seq-padded token ids (-1 == zero-pad row)
    fw_ref    : (V, kh*c_out) bf16 fused (embedding @ conv) weight,
                fw[v, k*c_out+o] = sum_d table[v,d] * Wconv[o,0,k,2+d]
    bconv_ref : (1, c_out)  f32
    wout_ref  : (c_out, N_PAD) f32 zero-padded Linear(32, 2) weight
    bout_ref  : (1, N_PAD)  f32
    o_ref     : (TB, N_PAD) f32
    """
    tb, seq = ids_ref.shape
    vocab = fw_ref.shape[0]

    # --- Embedding gather + Conv2d fused into ONE weight-stationary matmul ---
    # The one-hot of the padded ids (-1 matches nothing -> exact zero rows)
    # directly selects rows of the fused (table @ conv) weight on the MXU.
    # TODO(synk): for vocabularies too large for VMEM (v7x: 64 MiB) replace the
    # one-hot MXU gather with a scalar-prefetch / DMA row gather on fw_ref.
    ids = ids_ref[...]                                              # (TB, dim+4)
    onehot = (ids[:, :, None] ==
              lax.broadcasted_iota(jnp.int32, (tb, seq, vocab), 2)
              ).astype(jnp.bfloat16)                                # (TB, dim+4, V)
    y = lax.dot_general(onehot, fw_ref[...],
                        (((2,), (0,)), ((), ())),
                        preferred_element_type=jnp.float32)         # (TB, dim+4, kh*32)

    # --- Sum the kh shifted kernel-row taps; only rows [0, dim) feed the pool.
    # (Static slices; a pltpu.roll-based variant would move the shifts onto the
    #  XLU, but the win is modest at dim=16 and slices are proven-safe here.)
    acc = y[:, 0:dim, 0:c_out]
    for k in range(1, kh):                                          # static unroll
        acc = acc + y[:, k:k + dim, k * c_out:(k + 1) * c_out]      # (TB, dim, 32)

    # --- F.max_pool2d window of size dim; bias + ReLU hoisted past the max ---
    # (x -> ReLU(x + b) is monotone, so it commutes with the max: exact).
    pooled = jnp.maximum(jnp.max(acc, axis=1) + bconv_ref[...], 0.0)   # (TB, 32)

    # --- nn.Linear(32, 2), zero-padded to 128 lanes for an unmasked store. ---
    o_ref[...] = lax.dot_general(pooled, wout_ref[...],
                                 (((1,), (0,)), ((), ())),
                                 preferred_element_type=jnp.float32) + bout_ref[...]


def cnn_forward(x_ids, emb_table, w_conv, b_conv, w_out, b_out, *,
                max_len, dim, batch_tile=128):
    """x_ids: (B, max_len) int token ids. Returns (B, n_class) float32 logits."""
    B = x_ids.shape[0]
    # Linear(32, 2) after max_pool2d((1, dim)) requires exactly one pool window.
    assert dim <= max_len < 2 * dim, "cnn model requires max_len // dim == 1"
    assert batch_tile >= 8 and batch_tile % 8 == 0

    c_out, kh = w_conv.shape[0], w_conv.shape[2]     # 32, 5
    n_class = w_out.shape[0]                         # 2
    seq = dim + 4                                    # padded rows feeding the pool window

    # Adaptive batch tile: large (default 128) to amortize per-grid-step
    # overhead, but shrunk for small batches so (a) tiny B is not padded up to
    # a huge tile and (b) the grid keeps >= 2 steps whenever B > 8, letting the
    # "parallel" axis shard batch tiles across both v7x TensorCores.
    tb = min(batch_tile, max(8, ((B + 1) // 2 + 7) // 8 * 8))
    bp = ((B + tb - 1) // tb) * tb                   # batch padded to the tile size

    # Fold the seq-axis (H) zero padding and the batch padding into the ids:
    # -1 never matches a vocab id, so those rows gather to exact zeros.
    # n_rows truncation matches floor-mode max_pool over rows [:dim] (model
    # semantics): tokens beyond dim+2 never reach the single pool window.
    n_rows = min(max_len, dim + 2)
    ids_pad = jnp.full((bp, seq), -1, jnp.int32)
    ids_pad = ids_pad.at[:B, 2:2 + n_rows].set(x_ids[:, :n_rows].astype(jnp.int32))

    # Width (W) padding eliminated: padded columns are zero, so slice the conv
    # weight to its live dim columns, lay it out weight-stationary and FUSE the
    # embedding table into it (f32 product, single bf16 cast -> error kept
    # comparable to casting the table alone):
    #   w_all[d, k*32 + o]   = w_conv[o, 0, k, 2 + d]          (dim, 5*32)
    #   fused_w[v, k*32 + o] = sum_d table[v, d] * w_all[d, k*32 + o]
    w_sl = w_conv[:, 0, :, 2:2 + dim]                               # (32, 5, dim)
    w_all = jnp.transpose(w_sl, (2, 1, 0)).reshape(dim, kh * c_out)  # (dim, 160)
    fused_w = jnp.dot(emb_table.astype(jnp.float32), w_all.astype(jnp.float32),
                      precision=lax.Precision.HIGHEST).astype(jnp.bfloat16)  # (V, 160)

    bconv = b_conv.reshape(1, c_out).astype(jnp.float32)
    wout_pad = jnp.zeros((c_out, N_PAD), jnp.float32).at[:, :n_class].set(
        w_out.T.astype(jnp.float32))
    bout_pad = jnp.zeros((1, N_PAD), jnp.float32).at[:, :n_class].set(
        b_out.astype(jnp.float32))

    kernel = functools.partial(cnn_kernel, dim=dim, kh=kh, c_out=c_out)
    bcast = lambda arr: pl.BlockSpec(arr.shape, lambda i: (0, 0))   # weight broadcast

    out = pl.pallas_call(
        kernel,
        out_shape=jax.ShapeDtypeStruct((bp, N_PAD), jnp.float32),
        grid=(bp // tb,),
        in_specs=[
            pl.BlockSpec((tb, seq), lambda i: (i, 0)),   # padded ids, per batch tile
            bcast(fused_w),                              # fused (table @ conv) weight
            bcast(bconv),
            bcast(wout_pad),
            bcast(bout_pad),
        ],
        out_specs=pl.BlockSpec((tb, N_PAD), lambda i: (i, 0)),
        compiler_params=pltpu.CompilerParams(
            dimension_semantics=("parallel",),           # megacore-shard batch tiles (v7x)
            vmem_limit_bytes=32 * 1024 * 1024),          # explicit, v7x-safe VMEM budget
    )(ids_pad, fused_w, bconv, wout_pad, bout_pad)

    return out[:B, :n_class]                             # drop lane/batch padding


if __name__ == "__main__":
    # Small, consistent shapes: Linear(32, 2) after the (1, dim) max-pool
    # requires max_len // dim == 1, so pick max_len == dim.
    word_size, dim, max_len, B = 50, 16, 16, 2

    key = jax.random.PRNGKey(0)
    k1, k2, k3, k4, k5, k6 = jax.random.split(key, 6)
    emb_table = jax.random.normal(k1, (word_size, dim), jnp.float32)
    w_conv = jax.random.normal(k2, (32, 1, 5, dim + 4), jnp.float32) * 0.05
    b_conv = jax.random.normal(k3, (32,), jnp.float32) * 0.05
    w_out = jax.random.normal(k4, (2, 32), jnp.float32) * 0.1
    b_out = jax.random.normal(k5, (2,), jnp.float32) * 0.1
    x_ids = jax.random.randint(k6, (B, max_len), 0, word_size, dtype=jnp.int32)

    out = cnn_forward(x_ids, emb_table, w_conv, b_conv, w_out, b_out,
                      max_len=max_len, dim=dim)
    out = jax.block_until_ready(out)

    # Pure-JAX f32 reference (mirrors the PyTorch forward exactly). The kernel
    # uses a bf16 fused (table @ conv) weight on the MXU with f32 accumulation,
    # so the tolerance covers that single bf16 input rounding.
    hi = lax.Precision.HIGHEST
    emb = jnp.take(emb_table, x_ids, axis=0)
    pad = jnp.pad(emb, ((0, 0), (2, 2), (2, 2)))
    conv = lax.conv_general_dilated(
        pad[:, None, :, :], w_conv, window_strides=(1, 1), padding="VALID",
        dimension_numbers=("NCHW", "OIHW", "NCHW"), precision=hi)    # (B,32,max_len,1)
    conv = jnp.maximum(conv[..., 0] + b_conv[None, :, None], 0.0)    # (B,32,max_len)
    pooled = jnp.max(conv[:, :, :dim], axis=2)                       # (B,32)
    ref = jnp.dot(pooled, w_out.T, precision=hi) + b_out             # (B,2)

    assert out.shape == (B, 2) and out.dtype == jnp.float32
    assert jnp.allclose(out, ref, rtol=2e-2, atol=2e-2), (out, ref)
    print("KERNEL_OK")
</pallas_src>

<mosaic_0001>
module attributes {stable_mosaic.version = 11 : i64} {
  func.func @cnn_kernel(%arg0: i32, %arg1: memref<8x20xi32, #tpu.memory_space<vmem>>, %arg2: memref<50x160xbf16, #tpu.memory_space<vmem>>, %arg3: memref<1x32xf32, #tpu.memory_space<vmem>>, %arg4: memref<32x128xf32, #tpu.memory_space<vmem>>, %arg5: memref<1x128xf32, #tpu.memory_space<vmem>>, %arg6: memref<8x128xf32, #tpu.memory_space<vmem>>) attributes {dimension_semantics = [#tpu.dimension_semantics<parallel>], iteration_bounds = array<i64: 1>, scalar_prefetch = 0 : i64, scratch_operands = 0 : i64, tpu.core_type = #tpu.core_type<tc>, window_params = [{transform_indices = @transform_0, window_bounds = array<i64: 8, 20>}, {pipeline_mode = #tpu.pipeline_mode<synchronous>, transform_indices = @transform_1, window_bounds = array<i64: 50, 160>}, {pipeline_mode = #tpu.pipeline_mode<synchronous>, transform_indices = @transform_2, window_bounds = array<i64: 1, 32>}, {pipeline_mode = #tpu.pipeline_mode<synchronous>, transform_indices = @transform_3, window_bounds = array<i64: 32, 128>}, {pipeline_mode = #tpu.pipeline_mode<synchronous>, transform_indices = @transform_4, window_bounds = array<i64: 1, 128>}, {transform_indices = @transform_5, window_bounds = array<i64: 8, 128>}]} {
    %c0 = arith.constant 0 : index
    %c0_0 = arith.constant 0 : index
    %0 = vector.load %arg1[%c0, %c0_0] : memref<8x20xi32, #tpu.memory_space<vmem>>, vector<8x20xi32>
    %1 = vector.shape_cast %0 : vector<8x20xi32> to vector<8x20x1xi32>
    %2 = tpu.iota {dimensions = array<i32: 2>} : vector<8x20x50xi32>
    %3 = vector.broadcast %1 : vector<8x20x1xi32> to vector<8x20x50xi32>
    %4 = arith.cmpi eq, %3, %2 : vector<8x20x50xi32>
    %5 = arith.extui %4 : vector<8x20x50xi1> to vector<8x20x50xi32>
    %6 = arith.sitofp %5 : vector<8x20x50xi32> to vector<8x20x50xf32>
    %7 = arith.truncf %6 : vector<8x20x50xf32> to vector<8x20x50xbf16>
    %c0_1 = arith.constant 0 : index
    %c0_2 = arith.constant 0 : index
    %8 = vector.load %arg2[%c0_1, %c0_2] : memref<50x160xbf16, #tpu.memory_space<vmem>>, vector<50x160xbf16>
    %cst = arith.constant dense<0.000000e+00> : vector<8x20x160xf32>
    %9 = tpu.matmul %7, %8, %cst {dimension_numbers = #tpu.dot_dimension_numbers<[2], [0], [0, 1], [1], [0, 0, 0, 1, 1, 1], [], []>} : vector<8x20x50xbf16>, vector<50x160xbf16>, vector<8x20x160xf32> -> vector<8x20x160xf32>
    %10 = vector.extract_strided_slice %9 {offsets = [0, 0, 0], sizes = [8, 16, 32], strides = [1, 1, 1]} : vector<8x20x160xf32> to vector<8x16x32xf32>
    %11 = vector.extract_strided_slice %9 {offsets = [0, 1, 32], sizes = [8, 16, 32], strides = [1, 1, 1]} : vector<8x20x160xf32> to vector<8x16x32xf32>
    %12 = arith.addf %10, %11 : vector<8x16x32xf32>
    %13 = vector.extract_strided_slice %9 {offsets = [0, 2, 64], sizes = [8, 16, 32], strides = [1, 1, 1]} : vector<8x20x160xf32> to vector<8x16x32xf32>
    %14 = arith.addf %12, %13 : vector<8x16x32xf32>
    %15 = vector.extract_strided_slice %9 {offsets = [0, 3, 96], sizes = [8, 16, 32], strides = [1, 1, 1]} : vector<8x20x160xf32> to vector<8x16x32xf32>
    %16 = arith.addf %14, %15 : vector<8x16x32xf32>
    %17 = vector.extract_strided_slice %9 {offsets = [0, 4, 128], sizes = [8, 16, 32], strides = [1, 1, 1]} : vector<8x20x160xf32> to vector<8x16x32xf32>
    %18 = arith.addf %16, %17 : vector<8x16x32xf32>
    %cst_3 = arith.constant dense<0xFF800000> : vector<8x32xf32>
    %19 = vector.multi_reduction <maximumf>, %18, %cst_3 [1] : vector<8x16x32xf32> to vector<8x32xf32>
    %c0_4 = arith.constant 0 : index
    %c0_5 = arith.constant 0 : index
    %20 = vector.load %arg3[%c0_4, %c0_5] : memref<1x32xf32, #tpu.memory_space<vmem>>, vector<1x32xf32>
    %21 = vector.broadcast %20 : vector<1x32xf32> to vector<8x32xf32>
    %22 = arith.addf %19, %21 : vector<8x32xf32>
    %cst_6 = arith.constant 0.000000e+00 : f32
    %23 = vector.broadcast %cst_6 : f32 to vector<8x32xf32>
    %24 = arith.maximumf %22, %23 : vector<8x32xf32>
    %c0_7 = arith.constant 0 : index
    %c0_8 = arith.constant 0 : index
    %25 = vector.load %arg4[%c0_7, %c0_8] : memref<32x128xf32, #tpu.memory_space<vmem>>, vector<32x128xf32>
    %cst_9 = arith.constant dense<0.000000e+00> : vector<8x128xf32>
    %26 = tpu.matmul %24, %25, %cst_9 {dimension_numbers = #tpu.dot_dimension_numbers<[1], [0], [0], [1], [0, 0, 1, 1], [], []>} : vector<8x32xf32>, vector<32x128xf32>, vector<8x128xf32> -> vector<8x128xf32>
    %c0_10 = arith.constant 0 : index
    %c0_11 = arith.constant 0 : index
    %27 = vector.load %arg5[%c0_10, %c0_11] : memref<1x128xf32, #tpu.memory_space<vmem>>, vector<1x128xf32>
    %28 = vector.broadcast %27 : vector<1x128xf32> to vector<8x128xf32>
    %29 = arith.addf %26, %28 : vector<8x128xf32>
    %c0_12 = arith.constant 0 : index
    %c0_13 = arith.constant 0 : index
    %30 = vector.load %arg6[%c0_12, %c0_13] : memref<8x128xf32, #tpu.memory_space<vmem>>, vector<8x128xf32>
    tpu.vector_store %arg6[%c0_12, %c0_13], %29 {strides = array<i32>} : memref<8x128xf32, #tpu.memory_space<vmem>>, vector<8x128xf32>,
    return
  }
  func.func @transform_0(%arg0: i32) -> (i32, i32) {
    %c0_i32 = arith.constant 0 : i32
    %c0_i32_0 = arith.constant 0 : i32
    return %arg0, %c0_i32 : i32, i32
  }
  func.func @transform_1(%arg0: i32) -> (i32, i32) {
    %c0_i32 = arith.constant 0 : i32
    %c0_i32_0 = arith.constant 0 : i32
    %c0_i32_1 = arith.constant 0 : i32
    return %c0_i32, %c0_i32_0 : i32, i32
  }
  func.func @transform_2(%arg0: i32) -> (i32, i32) {
    %c0_i32 = arith.constant 0 : i32
    %c0_i32_0 = arith.constant 0 : i32
    %c0_i32_1 = arith.constant 0 : i32
    return %c0_i32, %c0_i32_0 : i32, i32
  }
  func.func @transform_3(%arg0: i32) -> (i32, i32) {
    %c0_i32 = arith.constant 0 : i32
    %c0_i32_0 = arith.constant 0 : i32
    %c0_i32_1 = arith.constant 0 : i32
    return %c0_i32, %c0_i32_0 : i32, i32
  }
  func.func @transform_4(%arg0: i32) -> (i32, i32) {
    %c0_i32 = arith.constant 0 : i32
    %c0_i32_0 = arith.constant 0 : i32
    %c0_i32_1 = arith.constant 0 : i32
    return %c0_i32, %c0_i32_0 : i32, i32
  }
  func.func @transform_5(%arg0: i32) -> (i32, i32) {
    %c0_i32 = arith.constant 0 : i32
    %c0_i32_0 = arith.constant 0 : i32
    return %arg0, %c0_i32 : i32, i32
  }
}

</mosaic_0001>

<llo_original>
// kernel: tpu_custom_call.1
$region0: #{tpu_custom_call.1}
  #allocation0 [shape = 'u32[]', space=smem, size = 0x4, offset = 0x4, fixed_abs, tag = 'smem constant byte address 0x4 - core index']
  #allocation1 [shape = 'u32[144,128]{1,0:T(1,128)}', space=vmem, size = 0x12000, scoped, tag = 'internal scratch']
  %s0 = inlined_call_operand.hbm [shape: s32[8,20], index: 0, kind: input, shape index: {}]
  %s1 = inlined_call_operand.hbm [shape: bf16[50,160], index: 1, kind: input, shape index: {}]
  %s2 = inlined_call_operand.vmem [shape: f32[1,32], index: 2, kind: input, shape index: {}]
  %s3 = inlined_call_operand.hbm [shape: f32[32,128], index: 3, kind: input, shape index: {}]
  %s4 = inlined_call_operand.vmem [shape: f32[1,128], index: 4, kind: input, shape index: {}]
  %s5 = inlined_call_operand.hbm [shape: f32[8,128], index: 5, kind: output, shape index: {}]
  %s6 = sld [smem:[#allocation0]]
  $region42: #{tpu_custom_call.1} parent=0
    _
  %s8 = ssub.s32 1, %s6
  %s9 = scalar_select 0, %s8, %s6
  $region1: #{tpu_custom_call.1} parent=0
    #allocation2 [shape = 'u8[4096]{0}', space=vmem, size = 0x1000, scoped, tag = 'input window, operand 0, single buffered']
    #allocation3 [shape = 's32[1]{0}', space=sflag, size = 0x4, scoped, tag = 'scoped memory for tpu_custom_call.1']
    #allocation4 [shape = 's32[1]{0}', space=sflag, size = 0x4, scoped, tag = 'scoped memory for tpu_custom_call.1']
    #allocation5 [shape = 'u8[28672]{0}', space=vmem, size = 0x7000, scoped, tag = 'input window, operand 1, single buffered']
    #allocation6 [shape = 's32[1]{0}', space=sflag, size = 0x4, scoped, tag = 'scoped memory for tpu_custom_call.1']
    #allocation7 [shape = 'u8[16384]{0}', space=vmem, size = 0x4000, scoped, tag = 'input window, operand 3, single buffered']
    #allocation8 [shape = 'u8[4096]{0}', space=vmem, size = 0x1000, scoped, tag = 'output window, operand 0, single buffered']
    %10 = vsyncpa [#allocation3], 0
    %11 = vsyncpa [#allocation6], 0
    %12 = vsyncpa [#allocation4], 0
    // Predicated region
    $region2: #{tpu_custom_call.1} parent=1 // pred_check
      _
    $region3: #{tpu_custom_call.1} parent=1 // pred_check_branch
      %14 = sbr.rel (0) target = $region5
    $region4: #{tpu_custom_call.1} parent=1 // pred_region
      %s16 = ssub.s32 128, 128
      %17 = vsyncadd [#allocation3], %s16
      %s19 = sshll.u32 [#allocation2], 4
      %s20 = int_to_ptr.vmem [resolvable:$true] %s19
      %22 = dma.hbm_to_vmem [thread:$0]  %s0, 128, %s20, [#allocation3]
    $region5: #{tpu_custom_call.1} parent=1 // pred_fallthru
      _
    // Predicated region
    $region6: #{tpu_custom_call.1} parent=1 // pred_check
      _
    $region7: #{tpu_custom_call.1} parent=1 // pred_check_branch
      %24 = sbr.rel (0) target = $region9
    $region8: #{tpu_custom_call.1} parent=1 // pred_region
      %s26 = ssub.s32 896, 896
      %27 = vsyncadd [#allocation6], %s26
      %s28 = sshll.u32 [#allocation5], 4
      %s29 = int_to_ptr.vmem [resolvable:$true] %s28
      %34 = dma.hbm_to_vmem [thread:$0]  %s1, 896, %s29, [#allocation6], 128, 128, 8
    $region9: #{tpu_custom_call.1} parent=1 // pred_fallthru
      _
    // Predicated region
    $region10: #{tpu_custom_call.1} parent=1 // pred_check
      _
    $region11: #{tpu_custom_call.1} parent=1 // pred_check_branch
      %36 = sbr.rel (0) target = $region13
    $region12: #{tpu_custom_call.1} parent=1 // pred_region
      _
    $region13: #{tpu_custom_call.1} parent=1 // pred_fallthru
      _
    // Predicated region
    $region14: #{tpu_custom_call.1} parent=1 // pred_check
      _
    $region15: #{tpu_custom_call.1} parent=1 // pred_check_branch
      %38 = sbr.rel (0) target = $region17
    $region16: #{tpu_custom_call.1} parent=1 // pred_region
      %s40 = ssub.s32 512, 512
      %41 = vsyncadd [#allocation6], %s40
      %s42 = sshll.u32 [#allocation7], 4
      %s43 = int_to_ptr.vmem [resolvable:$true] %s42
      %48 = dma.hbm_to_vmem [thread:$0]  %s3, 512, %s43, [#allocation6], 128, 128, 8
    $region17: #{tpu_custom_call.1} parent=1 // pred_fallthru
      _
    // Predicated region
    $region18: #{tpu_custom_call.1} parent=1 // pred_check
      _
    $region19: #{tpu_custom_call.1} parent=1 // pred_check_branch
      %50 = sbr.rel (0) target = $region21
    $region20: #{tpu_custom_call.1} parent=1 // pred_region
      _
    $region21: #{tpu_custom_call.1} parent=1 // pred_fallthru
      _
    // Predicated region
    $region22: #{tpu_custom_call.1} parent=1 // pred_check
      _
    $region23: #{tpu_custom_call.1} parent=1 // pred_check_branch
      %52 = sbr.rel (0) target = $region25
    $region24: #{tpu_custom_call.1} parent=1 // pred_region
      %53 = dma.done [#allocation3], 128
    $region25: #{tpu_custom_call.1} parent=1 // pred_fallthru
      _
    // Predicated region
    $region26: #{tpu_custom_call.1} parent=1 // pred_check
      _
    $region27: #{tpu_custom_call.1} parent=1 // pred_check_branch
      %55 = sbr.rel (0) target = $region29
    $region28: #{tpu_custom_call.1} parent=1 // pred_region
      %56 = dma.done [#allocation6], 896
    $region29: #{tpu_custom_call.1} parent=1 // pred_fallthru
      _
    // Predicated region
    $region30: #{tpu_custom_call.1} parent=1 // pred_check
      _
    $region31: #{tpu_custom_call.1} parent=1 // pred_check_branch
      %58 = sbr.rel (0) target = $region33
    $region32: #{tpu_custom_call.1} parent=1 // pred_region
      %59 = dma.done [#allocation6], 512
    $region33: #{tpu_custom_call.1} parent=1 // pred_fallthru
      _
    %v61 = vld [vmem:[#allocation2] sm:$0xff]
    %v62 = vlaneseq
    %v63 = vshrl.u32 %v62, 7
    %v64 = vsub.s32 0, %v63
    %v65 = vrot.slane %v61, %v64
    %67 = vbcast.lane.b32.xlu0 %v65, 256
    %v68 = vpop.permute.xlu0 %67
    %s70 = sor.u32 256, 8
    %71 = vbcast.lane.b32.xlu0 %v65, %s70
    %v72 = vpop.permute.xlu0 %71
    %s74 = sor.u32 256, 16
    %75 = vbcast.lane.b32.xlu0 %v65, %s74
    %v76 = vpop.permute.xlu0 %75
    %v77 = vlaneseq
    %v78 = vshrl.u32 %v77, 7
    %v79 = vsub.s32 1, %v78
    %v80 = vrot.slane %v61, %v79
    %82 = vbcast.lane.b32.xlu0 %v80, 256
    %v83 = vpop.permute.xlu0 %82
    %s85 = sor.u32 256, 8
    %86 = vbcast.lane.b32.xlu0 %v80, %s85
    %v87 = vpop.permute.xlu0 %86
    %s89 = sor.u32 256, 16
    %90 = vbcast.lane.b32.xlu0 %v80, %s89
    %v91 = vpop.permute.xlu0 %90
    %v92 = vlaneseq
    %v93 = vshrl.u32 %v92, 7
    %v94 = vsub.s32 2, %v93
    %v95 = vrot.slane %v61, %v94
    %97 = vbcast.lane.b32.xlu0 %v95, 256
    %v98 = vpop.permute.xlu0 %97
    %s100 = sor.u32 256, 8
    %101 = vbcast.lane.b32.xlu0 %v95, %s100
    %v102 = vpop.permute.xlu0 %101
    %s104 = sor.u32 256, 16
    %105 = vbcast.lane.b32.xlu0 %v95, %s104
    %v106 = vpop.permute.xlu0 %105
    %v107 = vlaneseq
    %v108 = vshrl.u32 %v107, 7
    %v109 = vsub.s32 3, %v108
    %v110 = vrot.slane %v61, %v109
    %112 = vbcast.lane.b32.xlu0 %v110, 256
    %v113 = vpop.permute.xlu0 %112
    %s115 = sor.u32 256, 8
    %116 = vbcast.lane.b32.xlu0 %v110, %s115
    %v117 = vpop.permute.xlu0 %116
    %s119 = sor.u32 256, 16
    %120 = vbcast.lane.b32.xlu0 %v110, %s119
    %v121 = vpop.permute.xlu0 %120
    %v122 = vlaneseq
    %v123 = vshrl.u32 %v122, 7
    %v124 = vsub.s32 4, %v123
    %v125 = vrot.slane %v61, %v124
    %127 = vbcast.lane.b32.xlu0 %v125, 256
    %v128 = vpop.permute.xlu0 %127
    %s130 = sor.u32 256, 8
    %131 = vbcast.lane.b32.xlu0 %v125, %s130
    %v132 = vpop.permute.xlu0 %131
    %s134 = sor.u32 256, 16
    %135 = vbcast.lane.b32.xlu0 %v125, %s134
    %v136 = vpop.permute.xlu0 %135
    %v137 = vlaneseq
    %v138 = vshrl.u32 %v137, 7
    %v139 = vsub.s32 5, %v138
    %v140 = vrot.slane %v61, %v139
    %142 = vbcast.lane.b32.xlu0 %v140, 256
    %v143 = vpop.permute.xlu0 %142
    %s145 = sor.u32 256, 8
    %146 = vbcast.lane.b32.xlu0 %v140, %s145
    %v147 = vpop.permute.xlu0 %146
    %s149 = sor.u32 256, 16
    %150 = vbcast.lane.b32.xlu0 %v140, %s149
    %v151 = vpop.permute.xlu0 %150
    %v152 = vlaneseq
    %v153 = vshrl.u32 %v152, 7
    %v154 = vsub.s32 6, %v153
    %v155 = vrot.slane %v61, %v154
    %157 = vbcast.lane.b32.xlu0 %v155, 256
    %v158 = vpop.permute.xlu0 %157
    %s160 = sor.u32 256, 8
    %161 = vbcast.lane.b32.xlu0 %v155, %s160
    %v162 = vpop.permute.xlu0 %161
    %s164 = sor.u32 256, 16
    %165 = vbcast.lane.b32.xlu0 %v155, %s164
    %v166 = vpop.permute.xlu0 %165
    %v167 = vlaneseq
    %v168 = vshrl.u32 %v167, 7
    %v169 = vsub.s32 7, %v168
    %v170 = vrot.slane %v61, %v169
    %172 = vbcast.lane.b32.xlu0 %v170, 256
    %v173 = vpop.permute.xlu0 %172
    %s175 = sor.u32 256, 8
    %176 = vbcast.lane.b32.xlu0 %v170, %s175
    %v177 = vpop.permute.xlu0 %176
    %s179 = sor.u32 256, 16
    %180 = vbcast.lane.b32.xlu0 %v170, %s179
    %v181 = vpop.permute.xlu0 %180
    %v182 = vlaneseq
    %v183 = vand.u32 %v182, 127
    %vm184 = vcmp.eq.s32.totalorder %v68, %v183
    %vm185 = vcmp.eq.s32.totalorder %v72, %v183
    %vm186 = vcmp.eq.s32.totalorder %v76, %v183
    %vm187 = vcmp.eq.s32.totalorder %v83, %v183
    %vm188 = vcmp.eq.s32.totalorder %v87, %v183
    %vm189 = vcmp.eq.s32.totalorder %v91, %v183
    %vm190 = vcmp.eq.s32.totalorder %v98, %v183
    %vm191 = vcmp.eq.s32.totalorder %v102, %v183
    %vm192 = vcmp.eq.s32.totalorder %v106, %v183
    %vm193 = vcmp.eq.s32.totalorder %v113, %v183
    %vm194 = vcmp.eq.s32.totalorder %v117, %v183
    %vm195 = vcmp.eq.s32.totalorder %v121, %v183
    %vm196 = vcmp.eq.s32.totalorder %v128, %v183
    %vm197 = vcmp.eq.s32.totalorder %v132, %v183
    %vm198 = vcmp.eq.s32.totalorder %v136, %v183
    %vm199 = vcmp.eq.s32.totalorder %v143, %v183
    %vm200 = vcmp.eq.s32.totalorder %v147, %v183
    %vm201 = vcmp.eq.s32.totalorder %v151, %v183
    %vm202 = vcmp.eq.s32.totalorder %v158, %v183
    %vm203 = vcmp.eq.s32.totalorder %v162, %v183
    %vm204 = vcmp.eq.s32.totalorder %v166, %v183
    %vm205 = vcmp.eq.s32.totalorder %v173, %v183
    %vm206 = vcmp.eq.s32.totalorder %v177, %v183
    %vm207 = vcmp.eq.s32.totalorder %v181, %v183
    %v208 = vsel %vm184, 1, 0
    %v209 = vsel %vm185, 1, 0
    %v210 = vsel %vm186, 1, 0
    %v211 = vsel %vm187, 1, 0
    %v212 = vsel %vm188, 1, 0
    %v213 = vsel %vm189, 1, 0
    %v214 = vsel %vm190, 1, 0
    %v215 = vsel %vm191, 1, 0
    %v216 = vsel %vm192, 1, 0
    %v217 = vsel %vm193, 1, 0
    %v218 = vsel %vm194, 1, 0
    %v219 = vsel %vm195, 1, 0
    %v220 = vsel %vm196, 1, 0
    %v221 = vsel %vm197, 1, 0
    %v222 = vsel %vm198, 1, 0
    %v223 = vsel %vm199, 1, 0
    %v224 = vsel %vm200, 1, 0
    %v225 = vsel %vm201, 1, 0
    %v226 = vsel %vm202, 1, 0
    %v227 = vsel %vm203, 1, 0
    %v228 = vsel %vm204, 1, 0
    %v229 = vsel %vm205, 1, 0
    %v230 = vsel %vm206, 1, 0
    %v231 = vsel %vm207, 1, 0
    %v232 = vcvt.s32.f32 %v208
    %v233 = vcvt.s32.f32 %v209
    %v234 = vcvt.s32.f32 %v210
    %v235 = vcvt.s32.f32 %v211
    %v236 = vcvt.s32.f32 %v212
    %v237 = vcvt.s32.f32 %v213
    %v238 = vcvt.s32.f32 %v214
    %v239 = vcvt.s32.f32 %v215
    %v240 = vcvt.s32.f32 %v216
    %v241 = vcvt.s32.f32 %v217
    %v242 = vcvt.s32.f32 %v218
    %v243 = vcvt.s32.f32 %v219
    %v244 = vcvt.s32.f32 %v220
    %v245 = vcvt.s32.f32 %v221
    %v246 = vcvt.s32.f32 %v222
    %v247 = vcvt.s32.f32 %v223
    %v248 = vcvt.s32.f32 %v224
    %v249 = vcvt.s32.f32 %v225
    %v250 = vcvt.s32.f32 %v226
    %v251 = vcvt.s32.f32 %v227
    %v252 = vcvt.s32.f32 %v228
    %v253 = vcvt.s32.f32 %v229
    %v254 = vcvt.s32.f32 %v230
    %v255 = vcvt.s32.f32 %v231
    %v256 = vpack.c.bf16 %v233, %v232
    %v257 = vpack.c.bf16 %v234, %v234
    %v258 = vpack.c.bf16 %v236, %v235
    %v259 = vpack.c.bf16 %v237, %v237
    %v260 = vpack.c.bf16 %v239, %v238
    %v261 = vpack.c.bf16 %v240, %v240
    %v262 = vpack.c.bf16 %v242, %v241
    %v263 = vpack.c.bf16 %v243, %v243
    %v264 = vpack.c.bf16 %v245, %v244
    %v265 = vpack.c.bf16 %v246, %v246
    %v266 = vpack.c.bf16 %v248, %v247
    %v267 = vpack.c.bf16 %v249, %v249
    %v268 = vpack.c.bf16 %v251, %v250
    %v269 = vpack.c.bf16 %v252, %v252
    %v270 = vpack.c.bf16 %v254, %v253
    %v271 = vpack.c.bf16 %v255, %v255
    %v272 = vld [vmem:[#allocation5] sm:$0xff]
    %v273 = vld [vmem:[#allocation5 + $0x8] sm:$0xff]
    %v274 = vld [vmem:[#allocation5 + $0x10] sm:$0xff]
    %v275 = vld [vmem:[#allocation5 + $0x18] sm:$0xff]
    %v276 = vld [vmem:[#allocation5 + $0x20] sm:$0xff]
    %v277 = vld [vmem:[#allocation5 + $0x28] sm:$0xff]
    %v278 = vld [vmem:[#allocation5 + $0x30] sm:$0x11]
    %v295 = vcombine.high %v256, %v256
    %v297 = vunpack.c.l.s4 1983009808
    %v298 = vunpack.c.0.s8 %v297
    %v299 = vlaneseq
    %v300 = vshrl.u32 %v299, 7
    %v301 = vsub.s32 %v298, %v300
    %v302 = vrot.slane %v256, %v301
    %v304 = vunpack.c.l.s4 1983009808
    %v305 = vunpack.c.0.s8 %v304
    %v306 = vlaneseq
    %v307 = vshrl.u32 %v306, 7
    %v308 = vsub.s32 %v305, %v307
    %v309 = vrot.slane %v295, %v308
    %v310 = vcombine.high %v302, %v302
    %v311 = vcombine.high %v309, %v309
    %v313 = vunpack.c.l.s4 1983009808
    %v314 = vunpack.c.0.s8 %v313
    %v315 = vlaneseq
    %v316 = vshrl.u32 %v315, 7
    %v317 = vsub.s32 %v314, %v316
    %v318 = vrot.slane %v257, %v317
    %v319 = vcombine.high %v258, %v258
    %v321 = vunpack.c.l.s4 1983009808
    %v322 = vunpack.c.0.s8 %v321
    %v323 = vlaneseq
    %v324 = vshrl.u32 %v323, 7
    %v325 = vsub.s32 %v322, %v324
    %v326 = vrot.slane %v258, %v325
    %v328 = vunpack.c.l.s4 1983009808
    %v329 = vunpack.c.0.s8 %v328
    %v330 = vlaneseq
    %v331 = vshrl.u32 %v330, 7
    %v332 = vsub.s32 %v329, %v331
    %v333 = vrot.slane %v319, %v332
    %v334 = vcombine.high %v326, %v326
    %v335 = vcombine.high %v333, %v333
    %v337 = vunpack.c.l.s4 1983009808
    %v338 = vunpack.c.0.s8 %v337
    %v339 = vlaneseq
    %v340 = vshrl.u32 %v339, 7
    %v341 = vsub.s32 %v338, %v340
    %v342 = vrot.slane %v259, %v341
    %v343 = vcombine.high %v260, %v260
    %v345 = vunpack.c.l.s4 1983009808
    %v346 = vunpack.c.0.s8 %v345
    %v347 = vlaneseq
    %v348 = vshrl.u32 %v347, 7
    %v349 = vsub.s32 %v346, %v348
    %v350 = vrot.slane %v260, %v349
    %v352 = vunpack.c.l.s4 1983009808
    %v353 = vunpack.c.0.s8 %v352
    %v354 = vlaneseq
    %v355 = vshrl.u32 %v354, 7
    %v356 = vsub.s32 %v353, %v355
    %v357 = vrot.slane %v343, %v356
    %v358 = vcombine.high %v350, %v350
    %v359 = vcombine.high %v357, %v357
    %v361 = vunpack.c.l.s4 1983009808
    %v362 = vunpack.c.0.s8 %v361
    %v363 = vlaneseq
    %v364 = vshrl.u32 %v363, 7
    %v365 = vsub.s32 %v362, %v364
    %v366 = vrot.slane %v261, %v365
    %v367 = vcombine.high %v262, %v262
    %v369 = vunpack.c.l.s4 1983009808
    %v370 = vunpack.c.0.s8 %v369
    %v371 = vlaneseq
    %v372 = vshrl.u32 %v371, 7
    %v373 = vsub.s32 %v370, %v372
    %v374 = vrot.slane %v262, %v373
    %v376 = vunpack.c.l.s4 1983009808
    %v377 = vunpack.c.0.s8 %v376
    %v378 = vlaneseq
    %v379 = vshrl.u32 %v378, 7
    %v380 = vsub.s32 %v377, %v379
    %v381 = vrot.slane %v367, %v380
    %v382 = vcombine.high %v374, %v374
    %v383 = vcombine.high %v381, %v381
    %v385 = vunpack.c.l.s4 1983009808
    %v386 = vunpack.c.0.s8 %v385
    %v387 = vlaneseq
    %v388 = vshrl.u32 %v387, 7
    %v389 = vsub.s32 %v386, %v388
    %v390 = vrot.slane %v263, %v389
    %v391 = vcombine.high %v264, %v264
    %v393 = vunpack.c.l.s4 1983009808
    %v394 = vunpack.c.0.s8 %v393
    %v395 = vlaneseq
    %v396 = vshrl.u32 %v395, 7
    %v397 = vsub.s32 %v394, %v396
    %v398 = vrot.slane %v264, %v397
    %v400 = vunpack.c.l.s4 1983009808
    %v401 = vunpack.c.0.s8 %v400
    %v402 = vlaneseq
    %v403 = vshrl.u32 %v402, 7
    %v404 = vsub.s32 %v401, %v403
    %v405 = vrot.slane %v391, %v404
    %v406 = vcombine.high %v398, %v398
    %v407 = vcombine.high %v405, %v405
    %v409 = vunpack.c.l.s4 1983009808
    %v410 = vunpack.c.0.s8 %v409
    %v411 = vlaneseq
    %v412 = vshrl.u32 %v411, 7
    %v413 = vsub.s32 %v410, %v412
    %v414 = vrot.slane %v265, %v413
    %v415 = vcombine.high %v266, %v266
    %v417 = vunpack.c.l.s4 1983009808
    %v418 = vunpack.c.0.s8 %v417
    %v419 = vlaneseq
    %v420 = vshrl.u32 %v419, 7
    %v421 = vsub.s32 %v418, %v420
    %v422 = vrot.slane %v266, %v421
    %v424 = vunpack.c.l.s4 1983009808
    %v425 = vunpack.c.0.s8 %v424
    %v426 = vlaneseq
    %v427 = vshrl.u32 %v426, 7
    %v428 = vsub.s32 %v425, %v427
    %v429 = vrot.slane %v415, %v428
    %v430 = vcombine.high %v422, %v422
    %v431 = vcombine.high %v429, %v429
    %v433 = vunpack.c.l.s4 1983009808
    %v434 = vunpack.c.0.s8 %v433
    %v435 = vlaneseq
    %v436 = vshrl.u32 %v435, 7
    %v437 = vsub.s32 %v434, %v436
    %v438 = vrot.slane %v267, %v437
    %v439 = vcombine.high %v268, %v268
    %v441 = vunpack.c.l.s4 1983009808
    %v442 = vunpack.c.0.s8 %v441
    %v443 = vlaneseq
    %v444 = vshrl.u32 %v443, 7
    %v445 = vsub.s32 %v442, %v444
    %v446 = vrot.slane %v268, %v445
    %v448 = vunpack.c.l.s4 1983009808
    %v449 = vunpack.c.0.s8 %v448
    %v450 = vlaneseq
    %v451 = vshrl.u32 %v450, 7
    %v452 = vsub.s32 %v449, %v451
    %v453 = vrot.slane %v439, %v452
    %v454 = vcombine.high %v446, %v446
    %v455 = vcombine.high %v453, %v453
    %v457 = vunpack.c.l.s4 1983009808
    %v458 = vunpack.c.0.s8 %v457
    %v459 = vlaneseq
    %v460 = vshrl.u32 %v459, 7
    %v461 = vsub.s32 %v458, %v460
    %v462 = vrot.slane %v269, %v461
    %v463 = vcombine.high %v270, %v270
    %v465 = vunpack.c.l.s4 1983009808
    %v466 = vunpack.c.0.s8 %v465
    %v467 = vlaneseq
    %v468 = vshrl.u32 %v467, 7
    %v469 = vsub.s32 %v466, %v468
    %v470 = vrot.slane %v270, %v469
    %v472 = vunpack.c.l.s4 1983009808
    %v473 = vunpack.c.0.s8 %v472
    %v474 = vlaneseq
    %v475 = vshrl.u32 %v474, 7
    %v476 = vsub.s32 %v473, %v475
    %v477 = vrot.slane %v463, %v476
    %v478 = vcombine.high %v470, %v470
    %v479 = vcombine.high %v477, %v477
    %v481 = vunpack.c.l.s4 1983009808
    %v482 = vunpack.c.0.s8 %v481
    %v483 = vlaneseq
    %v484 = vshrl.u32 %v483, 7
    %v485 = vsub.s32 %v482, %v484
    %v486 = vrot.slane %v271, %v485
    %v487 = vcombine.low %v302, %v310
    %v488 = vcombine.low %v309, %v311
    %v490 = vunpack.c.l.s4 1983009808
    %v491 = vunpack.c.0.s8 %v490
    %v492 = vlaneseq
    %v493 = vshrl.u32 %v492, 7
    %v494 = vsub.s32 %v491, %v493
    %v495 = vrot.slane %v487, %v494
    %v497 = vunpack.c.l.s4 1983009808
    %v498 = vunpack.c.0.s8 %v497
    %v499 = vlaneseq
    %v500 = vshrl.u32 %v499, 7
    %v501 = vsub.s32 %v498, %v500
    %v502 = vrot.slane %v488, %v501
    %v503 = vcombine.low %v495, %v502
    %v504 = vcombine.low %v318, %v326
    %v505 = vcombine.low %v334, %v333
    %v507 = vunpack.c.l.s4 1983009808
    %v508 = vunpack.c.0.s8 %v507
    %v509 = vlaneseq
    %v510 = vshrl.u32 %v509, 7
    %v511 = vsub.s32 %v508, %v510
    %v512 = vrot.slane %v504, %v511
    %v514 = vunpack.c.l.s4 1983009808
    %v515 = vunpack.c.0.s8 %v514
    %v516 = vlaneseq
    %v517 = vshrl.u32 %v516, 7
    %v518 = vsub.s32 %v515, %v517
    %v519 = vrot.slane %v505, %v518
    %v520 = vcombine.low %v512, %v519
    %v521 = vcombine.low %v335, %v342
    %v522 = vcombine.low %v350, %v358
    %v524 = vunpack.c.l.s4 1983009808
    %v525 = vunpack.c.0.s8 %v524
    %v526 = vlaneseq
    %v527 = vshrl.u32 %v526, 7
    %v528 = vsub.s32 %v525, %v527
    %v529 = vrot.slane %v521, %v528
    %v531 = vunpack.c.l.s4 1983009808
    %v532 = vunpack.c.0.s8 %v531
    %v533 = vlaneseq
    %v534 = vshrl.u32 %v533, 7
    %v535 = vsub.s32 %v532, %v534
    %v536 = vrot.slane %v522, %v535
    %v537 = vcombine.low %v529, %v536
    %v538 = vcombine.low %v357, %v359
    %v539 = vcombine.low %v366, %v374
    %v541 = vunpack.c.l.s4 1983009808
    %v542 = vunpack.c.0.s8 %v541
    %v543 = vlaneseq
    %v544 = vshrl.u32 %v543, 7
    %v545 = vsub.s32 %v542, %v544
    %v546 = vrot.slane %v538, %v545
    %v548 = vunpack.c.l.s4 1983009808
    %v549 = vunpack.c.0.s8 %v548
    %v550 = vlaneseq
    %v551 = vshrl.u32 %v550, 7
    %v552 = vsub.s32 %v549, %v551
    %v553 = vrot.slane %v539, %v552
    %v554 = vcombine.low %v546, %v553
    %v555 = vcombine.low %v382, %v381
    %v556 = vcombine.low %v383, %v390
    %v558 = vunpack.c.l.s4 1983009808
    %v559 = vunpack.c.0.s8 %v558
    %v560 = vlaneseq
    %v561 = vshrl.u32 %v560, 7
    %v562 = vsub.s32 %v559, %v561
    %v563 = vrot.slane %v555, %v562
    %v565 = vunpack.c.l.s4 1983009808
    %v566 = vunpack.c.0.s8 %v565
    %v567 = vlaneseq
    %v568 = vshrl.u32 %v567, 7
    %v569 = vsub.s32 %v566, %v568
    %v570 = vrot.slane %v556, %v569
    %v571 = vcombine.low %v563, %v570
    %v572 = vcombine.low %v398, %v406
    %v573 = vcombine.low %v405, %v407
    %v575 = vunpack.c.l.s4 1983009808
    %v576 = vunpack.c.0.s8 %v575
    %v577 = vlaneseq
    %v578 = vshrl.u32 %v577, 7
    %v579 = vsub.s32 %v576, %v578
    %v580 = vrot.slane %v572, %v579
    %v582 = vunpack.c.l.s4 1983009808
    %v583 = vunpack.c.0.s8 %v582
    %v584 = vlaneseq
    %v585 = vshrl.u32 %v584, 7
    %v586 = vsub.s32 %v583, %v585
    %v587 = vrot.slane %v573, %v586
    %v588 = vcombine.low %v580, %v587
    %v589 = vcombine.low %v414, %v422
    %v590 = vcombine.low %v430, %v429
    %v592 = vunpack.c.l.s4 1983009808
    %v593 = vunpack.c.0.s8 %v592
    %v594 = vlaneseq
    %v595 = vshrl.u32 %v594, 7
    %v596 = vsub.s32 %v593, %v595
    %v597 = vrot.slane %v589, %v596
    %v599 = vunpack.c.l.s4 1983009808
    %v600 = vunpack.c.0.s8 %v599
    %v601 = vlaneseq
    %v602 = vshrl.u32 %v601, 7
    %v603 = vsub.s32 %v600, %v602
    %v604 = vrot.slane %v590, %v603
    %v605 = vcombine.low %v597, %v604
    %v606 = vcombine.low %v431, %v438
    %v607 = vcombine.low %v446, %v454
    %v609 = vunpack.c.l.s4 1983009808
    %v610 = vunpack.c.0.s8 %v609
    %v611 = vlaneseq
    %v612 = vshrl.u32 %v611, 7
    %v613 = vsub.s32 %v610, %v612
    %v614 = vrot.slane %v606, %v613
    %v616 = vunpack.c.l.s4 1983009808
    %v617 = vunpack.c.0.s8 %v616
    %v618 = vlaneseq
    %v619 = vshrl.u32 %v618, 7
    %v620 = vsub.s32 %v617, %v619
    %v621 = vrot.slane %v607, %v620
    %v622 = vcombine.low %v614, %v621
    %v623 = vcombine.low %v453, %v455
    %v624 = vcombine.low %v462, %v470
    %v626 = vunpack.c.l.s4 1983009808
    %v627 = vunpack.c.0.s8 %v626
    %v628 = vlaneseq
    %v629 = vshrl.u32 %v628, 7
    %v630 = vsub.s32 %v627, %v629
    %v631 = vrot.slane %v623, %v630
    %v633 = vunpack.c.l.s4 1983009808
    %v634 = vunpack.c.0.s8 %v633
    %v635 = vlaneseq
    %v636 = vshrl.u32 %v635, 7
    %v637 = vsub.s32 %v634, %v636
    %v638 = vrot.slane %v624, %v637
    %v639 = vcombine.low %v631, %v638
    %v640 = vcombine.low %v478, %v477
    %v641 = vcombine.low %v479, %v486
    %v643 = vunpack.c.l.s4 1983009808
    %v644 = vunpack.c.0.s8 %v643
    %v645 = vlaneseq
    %v646 = vshrl.u32 %v645, 7
    %v647 = vsub.s32 %v644, %v646
    %v648 = vrot.slane %v640, %v647
    %v650 = vunpack.c.l.s4 1983009808
    %v651 = vunpack.c.0.s8 %v650
    %v652 = vlaneseq
    %v653 = vshrl.u32 %v652, 7
    %v654 = vsub.s32 %v651, %v653
    %v655 = vrot.slane %v641, %v654
    %v656 = vcombine.low %v648, %v655
    %v664 = vunpack.c.l.b16 %v272
    %v665 = vunpack.c.h.b16 %v272
    %v666 = vunpack.c.l.b16 %v273
    %v667 = vunpack.c.h.b16 %v273
    %v668 = vunpack.c.l.b16 %v274
    %v669 = vunpack.c.h.b16 %v274
    %v670 = vunpack.c.l.b16 %v275
    %v671 = vunpack.c.h.b16 %v275
    %v672 = vunpack.c.l.b16 %v276
    %v673 = vunpack.c.h.b16 %v276
    %v674 = vunpack.c.l.b16 %v277
    %v675 = vunpack.c.h.b16 %v277
    %v676 = vunpack.c.l.b16 %v278
    %v677 = vunpack.c.h.b16 %v278
    %v678 = vpack.c.b16 %v666, %v664
    %v679 = vpack.c.b16 %v667, %v665
    %v680 = vpack.c.b16 %v670, %v668
    %v681 = vpack.c.b16 %v671, %v669
    %v682 = vpack.c.b16 %v674, %v672
    %v683 = vpack.c.b16 %v675, %v673
    %v684 = vpack.c.b16 %v676, %v676
    %v685 = vpack.c.b16 %v677, %v677
    %vm692 = vcmask 408576
    %v694 = vsel %vm692, %v503, 0
    %v697 = vsel %vm692, %v520, 0
    %v700 = vsel %vm692, %v537, 0
    %v703 = vsel %vm692, %v554, 0
    %v706 = vsel %vm692, %v571, 0
    %v709 = vsel %vm692, %v588, 0
    %v712 = vsel %vm692, %v605, 0
    %v715 = vsel %vm692, %v622, 0
    %v718 = vsel %vm692, %v639, 0
    %v721 = vsel %vm692, %v656, 0
    %vm723 = vcmask 1040384
    %v725 = vsel %vm723, %v684, 0
    %v728 = vsel %vm723, %v685, 0
    %730 = vmatprep.subr.bf16.mxu0 %v679
    %731 = vmatpush1.bf16.msra.mxu0 %v678
    %732 = vmatprep.subr.bf16.mxu0 %v681
    %733 = vmatpush1.bf16.msra.mxu0 %v680
    %734 = vmatprep.subr.bf16.mxu0 %v683
    %735 = vmatpush1.bf16.msra.mxu0 %v682
    %736 = vmatprep.subr.bf16.mxu0 %v728
    %737 = vmatpush1.bf16.msra.mxu0 %v725
    %738 = vmatprep.subr.bf16.mxu0 0
    %739 = vmatpush1.bf16.msra.mxu0 0
    %740 = vmatprep.subr.bf16.mxu0 0
    %741 = vmatpush1.bf16.msra.mxu0 0
    %742 = vmatprep.subr.bf16.mxu0 0
    %743 = vmatpush1.bf16.msra.mxu0 0
    %744 = vmatprep.subr.bf16.mxu0 0
    %745 = vmatpush1.bf16.msra.mxu0 0
    %746 = vmatprep.subr.bf16.mxu0 0
    %747 = vmatpush1.bf16.msra.mxu0 0
    %748 = vmatprep.subr.bf16.mxu0 0
    %749 = vmatpush1.bf16.msra.mxu0 0
    %750 = vmatprep.subr.bf16.mxu0 0
    %751 = vmatpush1.bf16.msra.mxu0 0
    %752 = vmatprep.subr.bf16.mxu0 0
    %753 = vmatpush1.bf16.msra.mxu0 0
    %754 = vmatprep.subr.bf16.mxu0 0
    %755 = vmatpush1.bf16.msra.mxu0 0
    %756 = vmatprep.subr.bf16.mxu0 0
    %757 = vmatpush1.bf16.msra.mxu0 0
    %758 = vmatprep.subr.bf16.mxu0 0
    %759 = vmatpush1.bf16.msra.mxu0 0
    %760 = vmatprep.subr.bf16.mxu0 0
    %761 = vmatpush1.bf16.msra.mxu0 0
    %762 = vmatprep.mubr.bf16.mxu0 0
    %763 = vmatmul.mubr.bf16.gmra.mrb[0].mxu0 %v694
    %v764 = vpop.f32.mrb[0].mxu0
    %v765 = vadd.f32 0.0, %v764
    %v766 = vpop.f32.mrb[0].mxu0
    %v767 = vadd.f32 0.0, %v766
    %v768 = vpop.f32.mrb[0].mxu0
    %v769 = vadd.f32 0.0, %v768
    %v770 = vpop.f32.mrb[0].mxu0
    %v771 = vadd.f32 0.0, %v770
    %772 = vmatprep.mubr.bf16.mxu0 0
    %773 = vmatmul.mubr.bf16.gmra.mrb[0].mxu0 %v697
    %v774 = vpop.f32.mrb[0].mxu0
    %v775 = vadd.f32 0.0, %v774
    %v776 = vpop.f32.mrb[0].mxu0
    %v777 = vadd.f32 0.0, %v776
    %v778 = vpop.f32.mrb[0].mxu0
    %v779 = vadd.f32 0.0, %v778
    %v780 = vpop.f32.mrb[0].mxu0
    %v781 = vadd.f32 0.0, %v780
    %782 = vmatprep.mubr.bf16.mxu0 0
    %783 = vmatmul.mubr.bf16.gmra.mrb[0].mxu0 %v700
    %v784 = vpop.f32.mrb[0].mxu0
    %v785 = vadd.f32 0.0, %v784
    %v786 = vpop.f32.mrb[0].mxu0
    %v787 = vadd.f32 0.0, %v786
    %v788 = vpop.f32.mrb[0].mxu0
    %v789 = vadd.f32 0.0, %v788
    %v790 = vpop.f32.mrb[0].mxu0
    %v791 = vadd.f32 0.0, %v790
    %792 = vmatprep.mubr.bf16.mxu0 0
    %793 = vmatmul.mubr.bf16.gmra.mrb[0].mxu0 %v703
    %v794 = vpop.f32.mrb[0].mxu0
    %v795 = vadd.f32 0.0, %v794
    %v796 = vpop.f32.mrb[0].mxu0
    %v797 = vadd.f32 0.0, %v796
    %v798 = vpop.f32.mrb[0].mxu0
    %v799 = vadd.f32 0.0, %v798
    %v800 = vpop.f32.mrb[0].mxu0
    %v801 = vadd.f32 0.0, %v800
    %802 = vmatprep.mubr.bf16.mxu0 0
    %803 = vmatmul.mubr.bf16.gmra.mrb[0].mxu0 %v706
    %v804 = vpop.f32.mrb[0].mxu0
    %v805 = vadd.f32 0.0, %v804
    %v806 = vpop.f32.mrb[0].mxu0
    %v807 = vadd.f32 0.0, %v806
    %v808 = vpop.f32.mrb[0].mxu0
    %v809 = vadd.f32 0.0, %v808
    %v810 = vpop.f32.mrb[0].mxu0
    %v811 = vadd.f32 0.0, %v810
    %812 = vmatprep.mubr.bf16.mxu0 0
    %813 = vmatmul.mubr.bf16.gmra.mrb[0].mxu0 %v709
    %v814 = vpop.f32.mrb[0].mxu0
    %v815 = vadd.f32 0.0, %v814
    %v816 = vpop.f32.mrb[0].mxu0
    %v817 = vadd.f32 0.0, %v816
    %v818 = vpop.f32.mrb[0].mxu0
    %v819 = vadd.f32 0.0, %v818
    %v820 = vpop.f32.mrb[0].mxu0
    %v821 = vadd.f32 0.0, %v820
    %822 = vmatprep.mubr.bf16.mxu0 0
    %823 = vmatmul.mubr.bf16.gmra.mrb[0].mxu0 %v712
    %v824 = vpop.f32.mrb[0].mxu0
    %v825 = vadd.f32 0.0, %v824
    %v826 = vpop.f32.mrb[0].mxu0
    %v827 = vadd.f32 0.0, %v826
    %v828 = vpop.f32.mrb[0].mxu0
    %v829 = vadd.f32 0.0, %v828
    %v830 = vpop.f32.mrb[0].mxu0
    %v831 = vadd.f32 0.0, %v830
    %832 = vmatprep.mubr.bf16.mxu0 0
    %833 = vmatmul.mubr.bf16.gmra.mrb[0].mxu0 %v715
    %v834 = vpop.f32.mrb[0].mxu0
    %v835 = vadd.f32 0.0, %v834
    %v836 = vpop.f32.mrb[0].mxu0
    %v837 = vadd.f32 0.0, %v836
    %v838 = vpop.f32.mrb[0].mxu0
    %v839 = vadd.f32 0.0, %v838
    %v840 = vpop.f32.mrb[0].mxu0
    %v841 = vadd.f32 0.0, %v840
    %842 = vmatprep.mubr.bf16.mxu0 0
    %843 = vmatmul.mubr.bf16.gmra.mrb[0].mxu0 %v718
    %v844 = vpop.f32.mrb[0].mxu0
    %v845 = vadd.f32 0.0, %v844
    %v846 = vpop.f32.mrb[0].mxu0
    %v847 = vadd.f32 0.0, %v846
    %v848 = vpop.f32.mrb[0].mxu0
    %v849 = vadd.f32 0.0, %v848
    %v850 = vpop.f32.mrb[0].mxu0
    %v851 = vadd.f32 0.0, %v850
    %852 = vmatprep.mubr.bf16.mxu0 0
    %853 = vmatmul.mubr.bf16.gmra.mrb[0].mxu0 %v721
    %v854 = vpop.f32.mrb[0].mxu0
    %v855 = vadd.f32 0.0, %v854
    %v856 = vpop.f32.mrb[0].mxu0
    %v857 = vadd.f32 0.0, %v856
    %v858 = vpop.f32.mrb[0].mxu0
    %v859 = vadd.f32 0.0, %v858
    %v860 = vpop.f32.mrb[0].mxu0
    %v861 = vadd.f32 0.0, %v860
    %862 = vdwg.mxu0
    %v903 = vcombine.low %v765, %v767
    %v904 = vcombine.high %v765, %v767
    %v905 = vcombine.low %v769, %v771
    %v906 = vcombine.high %v769, %v771
    %v907 = vcombine.low %v775, %v777
    %v908 = vcombine.high %v775, %v777
    %v909 = vcombine.low %v779, %v781
    %v910 = vcombine.high %v779, %v781
    %v911 = vcombine.low %v785, %v787
    %v912 = vcombine.high %v785, %v787
    %v913 = vcombine.low %v789, %v791
    %v914 = vcombine.high %v789, %v791
    %v915 = vcombine.low %v795, %v797
    %v916 = vcombine.high %v795, %v797
    %v917 = vcombine.low %v799, %v801
    %v918 = vcombine.high %v799, %v801
    %v919 = vcombine.low %v805, %v807
    %v920 = vcombine.high %v805, %v807
    %v921 = vcombine.low %v809, %v811
    %v922 = vcombine.high %v809, %v811
    %v923 = vcombine.low %v815, %v817
    %v924 = vcombine.high %v815, %v817
    %v925 = vcombine.low %v819, %v821
    %v926 = vcombine.high %v819, %v821
    %v927 = vcombine.low %v825, %v827
    %v928 = vcombine.high %v825, %v827
    %v929 = vcombine.low %v829, %v831
    %v930 = vcombine.high %v829, %v831
    %v931 = vcombine.low %v835, %v837
    %v932 = vcombine.high %v835, %v837
    %v933 = vcombine.low %v839, %v841
    %v934 = vcombine.high %v839, %v841
    %v935 = vcombine.low %v845, %v847
    %v936 = vcombine.high %v845, %v847
    %v937 = vcombine.low %v849, %v851
    %v938 = vcombine.high %v849, %v851
    %v939 = vcombine.low %v855, %v857
    %v940 = vcombine.high %v855, %v857
    %v941 = vcombine.low %v859, %v861
    %v942 = vcombine.high %v859, %v861
    %vm975 = vcmask 1042432
    %vm976 = vcmask 1046532
    %vm977 = vmor %vm975, %vm976
    %v978 = vrot.slane %v903, 5
    %v979 = vrot.slane %v978, 4
    %v980 = vrot.slane %v904, 5
    %v981 = vsel %vm977, %v979, %v980
    %v982 = vrot.slane %v980, 4
    %v983 = vrot.slane %v905, 5
    %v984 = vsel %vm977, %v982, %v983
    %v985 = vrot.slane %v983, 4
    %v986 = vrot.slane %v906, 5
    %v987 = vsel %vm977, %v985, %v986
    %v988 = vrot.slane %v986, 4
    %v989 = vrot.slane %v907, 5
    %v990 = vsel %vm977, %v988, %v989
    %v991 = vrot.slane %v908, 5
    %v992 = vrot.slane %v991, 4
    %v993 = vrot.slane %v909, 5
    %v994 = vsel %vm977, %v992, %v993
    %v995 = vrot.slane %v993, 4
    %v996 = vrot.slane %v910, 5
    %v997 = vsel %vm977, %v995, %v996
    %v998 = vrot.slane %v996, 4
    %v999 = vrot.slane %v911, 5
    %v1000 = vsel %vm977, %v998, %v999
    %v1001 = vrot.slane %v999, 4
    %v1002 = vrot.slane %v912, 5
    %v1003 = vsel %vm977, %v1001, %v1002
    %v1004 = vrot.slane %v913, 5
    %v1005 = vrot.slane %v1004, 4
    %v1006 = vrot.slane %v914, 5
    %v1007 = vsel %vm977, %v1005, %v1006
    %v1008 = vrot.slane %v1006, 4
    %v1009 = vrot.slane %v915, 5
    %v1010 = vsel %vm977, %v1008, %v1009
    %v1011 = vrot.slane %v1009, 4
    %v1012 = vrot.slane %v916, 5
    %v1013 = vsel %vm977, %v1011, %v1012
    %v1014 = vrot.slane %v1012, 4
    %v1015 = vrot.slane %v917, 5
    %v1016 = vsel %vm977, %v1014, %v1015
    %v1017 = vrot.slane %v918, 5
    %v1018 = vrot.slane %v1017, 4
    %v1019 = vrot.slane %v919, 5
    %v1020 = vsel %vm977, %v1018, %v1019
    %v1021 = vrot.slane %v1019, 4
    %v1022 = vrot.slane %v920, 5
    %v1023 = vsel %vm977, %v1021, %v1022
    %v1024 = vrot.slane %v1022, 4
    %v1025 = vrot.slane %v921, 5
    %v1026 = vsel %vm977, %v1024, %v1025
    %v1027 = vrot.slane %v1025, 4
    %v1028 = vrot.slane %v922, 5
    %v1029 = vsel %vm977, %v1027, %v1028
    %v1030 = vrot.slane %v923, 5
    %v1031 = vrot.slane %v1030, 4
    %v1032 = vrot.slane %v924, 5
    %v1033 = vsel %vm977, %v1031, %v1032
    %v1034 = vrot.slane %v1032, 4
    %v1035 = vrot.slane %v925, 5
    %v1036 = vsel %vm977, %v1034, %v1035
    %v1037 = vrot.slane %v1035, 4
    %v1038 = vrot.slane %v926, 5
    %v1039 = vsel %vm977, %v1037, %v1038
    %v1040 = vrot.slane %v1038, 4
    %v1041 = vrot.slane %v927, 5
    %v1042 = vsel %vm977, %v1040, %v1041
    %v1043 = vrot.slane %v928, 5
    %v1044 = vrot.slane %v1043, 4
    %v1045 = vrot.slane %v929, 5
    %v1046 = vsel %vm977, %v1044, %v1045
    %v1047 = vrot.slane %v1045, 4
    %v1048 = vrot.slane %v930, 5
    %v1049 = vsel %vm977, %v1047, %v1048
    %v1050 = vrot.slane %v1048, 4
    %v1051 = vrot.slane %v931, 5
    %v1052 = vsel %vm977, %v1050, %v1051
    %v1053 = vrot.slane %v1051, 4
    %v1054 = vrot.slane %v932, 5
    %v1055 = vsel %vm977, %v1053, %v1054
    %v1056 = vrot.slane %v933, 5
    %v1057 = vrot.slane %v1056, 4
    %v1058 = vrot.slane %v934, 5
    %v1059 = vsel %vm977, %v1057, %v1058
    %v1060 = vrot.slane %v1058, 4
    %v1061 = vrot.slane %v935, 5
    %v1062 = vsel %vm977, %v1060, %v1061
    %v1063 = vrot.slane %v1061, 4
    %v1064 = vrot.slane %v936, 5
    %v1065 = vsel %vm977, %v1063, %v1064
    %v1066 = vrot.slane %v1064, 4
    %v1067 = vrot.slane %v937, 5
    %v1068 = vsel %vm977, %v1066, %v1067
    %v1069 = vrot.slane %v938, 5
    %v1070 = vrot.slane %v1069, 4
    %v1071 = vrot.slane %v939, 5
    %v1072 = vsel %vm977, %v1070, %v1071
    %v1073 = vrot.slane %v1071, 4
    %v1074 = vrot.slane %v940, 5
    %v1075 = vsel %vm977, %v1073, %v1074
    %v1076 = vrot.slane %v1074, 4
    %v1077 = vrot.slane %v941, 5
    %v1078 = vsel %vm977, %v1076, %v1077
    %v1079 = vrot.slane %v1077, 4
    %v1080 = vrot.slane %v942, 5
    %v1081 = vsel %vm977, %v1079, %v1080
    %1082 = vrot.lane.b32.xlu0 %v981, 96
    %v1083 = vpop.permute.xlu0 %1082
    %1084 = vrot.lane.b32.xlu0 %v984, 96
    %v1085 = vpop.permute.xlu0 %1084
    %1086 = vrot.lane.b32.xlu0 %v987, 96
    %v1087 = vpop.permute.xlu0 %1086
    %1088 = vrot.lane.b32.xlu0 %v990, 96
    %v1089 = vpop.permute.xlu0 %1088
    %1090 = vrot.lane.b32.xlu0 %v994, 96
    %v1091 = vpop.permute.xlu0 %1090
    %1092 = vrot.lane.b32.xlu0 %v997, 96
    %v1093 = vpop.permute.xlu0 %1092
    %1094 = vrot.lane.b32.xlu0 %v1000, 96
    %v1095 = vpop.permute.xlu0 %1094
    %1096 = vrot.lane.b32.xlu0 %v1003, 96
    %v1097 = vpop.permute.xlu0 %1096
    %1098 = vrot.lane.b32.xlu0 %v1007, 96
    %v1099 = vpop.permute.xlu0 %1098
    %1100 = vrot.lane.b32.xlu0 %v1010, 96
    %v1101 = vpop.permute.xlu0 %1100
    %1102 = vrot.lane.b32.xlu0 %v1013, 96
    %v1103 = vpop.permute.xlu0 %1102
    %1104 = vrot.lane.b32.xlu0 %v1016, 96
    %v1105 = vpop.permute.xlu0 %1104
    %1106 = vrot.lane.b32.xlu0 %v1020, 96
    %v1107 = vpop.permute.xlu0 %1106
    %1108 = vrot.lane.b32.xlu0 %v1023, 96
    %v1109 = vpop.permute.xlu0 %1108
    %1110 = vrot.lane.b32.xlu0 %v1026, 96
    %v1111 = vpop.permute.xlu0 %1110
    %1112 = vrot.lane.b32.xlu0 %v1029, 96
    %v1113 = vpop.permute.xlu0 %1112
    %1114 = vrot.lane.b32.xlu0 %v1033, 96
    %v1115 = vpop.permute.xlu0 %1114
    %1116 = vrot.lane.b32.xlu0 %v1036, 96
    %v1117 = vpop.permute.xlu0 %1116
    %1118 = vrot.lane.b32.xlu0 %v1039, 96
    %v1119 = vpop.permute.xlu0 %1118
    %1120 = vrot.lane.b32.xlu0 %v1042, 96
    %v1121 = vpop.permute.xlu0 %1120
    %1122 = vrot.lane.b32.xlu0 %v1046, 96
    %v1123 = vpop.permute.xlu0 %1122
    %1124 = vrot.lane.b32.xlu0 %v1049, 96
    %v1125 = vpop.permute.xlu0 %1124
    %1126 = vrot.lane.b32.xlu0 %v1052, 96
    %v1127 = vpop.permute.xlu0 %1126
    %1128 = vrot.lane.b32.xlu0 %v1055, 96
    %v1129 = vpop.permute.xlu0 %1128
    %1130 = vrot.lane.b32.xlu0 %v1059, 96
    %v1131 = vpop.permute.xlu0 %1130
    %1132 = vrot.lane.b32.xlu0 %v1062, 96
    %v1133 = vpop.permute.xlu0 %1132
    %1134 = vrot.lane.b32.xlu0 %v1065, 96
    %v1135 = vpop.permute.xlu0 %1134
    %1136 = vrot.lane.b32.xlu0 %v1068, 96
    %v1137 = vpop.permute.xlu0 %1136
    %1138 = vrot.lane.b32.xlu0 %v1072, 96
    %v1139 = vpop.permute.xlu0 %1138
    %1140 = vrot.lane.b32.xlu0 %v1075, 96
    %v1141 = vpop.permute.xlu0 %1140
    %1142 = vrot.lane.b32.xlu0 %v1078, 96
    %v1143 = vpop.permute.xlu0 %1142
    %1144 = vrot.lane.b32.xlu0 %v1081, 96
    %v1145 = vpop.permute.xlu0 %1144
    %v1178 = vadd.f32 %v903, %v1083
    %v1179 = vadd.f32 %v904, %v1085
    %v1180 = vadd.f32 %v905, %v1087
    %v1181 = vadd.f32 %v906, %v1089
    %v1182 = vadd.f32 %v908, %v1091
    %v1183 = vadd.f32 %v909, %v1093
    %v1184 = vadd.f32 %v910, %v1095
    %v1185 = vadd.f32 %v911, %v1097
    %v1186 = vadd.f32 %v913, %v1099
    %v1187 = vadd.f32 %v914, %v1101
    %v1188 = vadd.f32 %v915, %v1103
    %v1189 = vadd.f32 %v916, %v1105
    %v1190 = vadd.f32 %v918, %v1107
    %v1191 = vadd.f32 %v919, %v1109
    %v1192 = vadd.f32 %v920, %v1111
    %v1193 = vadd.f32 %v921, %v1113
    %v1194 = vadd.f32 %v923, %v1115
    %v1195 = vadd.f32 %v924, %v1117
    %v1196 = vadd.f32 %v925, %v1119
    %v1197 = vadd.f32 %v926, %v1121
    %v1198 = vadd.f32 %v928, %v1123
    %v1199 = vadd.f32 %v929, %v1125
    %v1200 = vadd.f32 %v930, %v1127
    %v1201 = vadd.f32 %v931, %v1129
    %v1202 = vadd.f32 %v933, %v1131
    %v1203 = vadd.f32 %v934, %v1133
    %v1204 = vadd.f32 %v935, %v1135
    %v1205 = vadd.f32 %v936, %v1137
    %v1206 = vadd.f32 %v938, %v1139
    %v1207 = vadd.f32 %v939, %v1141
    %v1208 = vadd.f32 %v940, %v1143
    %v1209 = vadd.f32 %v941, %v1145
    %vm1210 = vcmask 1041408
    %vm1211 = vcmask 1045508
    %vm1212 = vmor %vm1210, %vm1211
    %v1213 = vrot.slane %v903, 6
    %v1214 = vrot.slane %v1213, 4
    %v1215 = vrot.slane %v904, 6
    %v1216 = vsel %vm1212, %v1214, %v1215
    %v1217 = vrot.slane %v1215, 4
    %v1218 = vrot.slane %v905, 6
    %v1219 = vsel %vm1212, %v1217, %v1218
    %v1220 = vrot.slane %v1218, 4
    %v1221 = vrot.slane %v906, 6
    %v1222 = vsel %vm1212, %v1220, %v1221
    %v1223 = vrot.slane %v1221, 4
    %v1224 = vrot.slane %v907, 6
    %v1225 = vsel %vm1212, %v1223, %v1224
    %v1226 = vrot.slane %v908, 6
    %v1227 = vrot.slane %v1226, 4
    %v1228 = vrot.slane %v909, 6
    %v1229 = vsel %vm1212, %v1227, %v1228
    %v1230 = vrot.slane %v1228, 4
    %v1231 = vrot.slane %v910, 6
    %v1232 = vsel %vm1212, %v1230, %v1231
    %v1233 = vrot.slane %v1231, 4
    %v1234 = vrot.slane %v911, 6
    %v1235 = vsel %vm1212, %v1233, %v1234
    %v1236 = vrot.slane %v1234, 4
    %v1237 = vrot.slane %v912, 6
    %v1238 = vsel %vm1212, %v1236, %v1237
    %v1239 = vrot.slane %v913, 6
    %v1240 = vrot.slane %v1239, 4
    %v1241 = vrot.slane %v914, 6
    %v1242 = vsel %vm1212, %v1240, %v1241
    %v1243 = vrot.slane %v1241, 4
    %v1244 = vrot.slane %v915, 6
    %v1245 = vsel %vm1212, %v1243, %v1244
    %v1246 = vrot.slane %v1244, 4
    %v1247 = vrot.slane %v916, 6
    %v1248 = vsel %vm1212, %v1246, %v1247
    %v1249 = vrot.slane %v1247, 4
    %v1250 = vrot.slane %v917, 6
    %v1251 = vsel %vm1212, %v1249, %v1250
    %v1252 = vrot.slane %v918, 6
    %v1253 = vrot.slane %v1252, 4
    %v1254 = vrot.slane %v919, 6
    %v1255 = vsel %vm1212, %v1253, %v1254
    %v1256 = vrot.slane %v1254, 4
    %v1257 = vrot.slane %v920, 6
    %v1258 = vsel %vm1212, %v1256, %v1257
    %v1259 = vrot.slane %v1257, 4
    %v1260 = vrot.slane %v921, 6
    %v1261 = vsel %vm1212, %v1259, %v1260
    %v1262 = vrot.slane %v1260, 4
    %v1263 = vrot.slane %v922, 6
    %v1264 = vsel %vm1212, %v1262, %v1263
    %v1265 = vrot.slane %v923, 6
    %v1266 = vrot.slane %v1265, 4
    %v1267 = vrot.slane %v924, 6
    %v1268 = vsel %vm1212, %v1266, %v1267
    %v1269 = vrot.slane %v1267, 4
    %v1270 = vrot.slane %v925, 6
    %v1271 = vsel %vm1212, %v1269, %v1270
    %v1272 = vrot.slane %v1270, 4
    %v1273 = vrot.slane %v926, 6
    %v1274 = vsel %vm1212, %v1272, %v1273
    %v1275 = vrot.slane %v1273, 4
    %v1276 = vrot.slane %v927, 6
    %v1277 = vsel %vm1212, %v1275, %v1276
    %v1278 = vrot.slane %v928, 6
    %v1279 = vrot.slane %v1278, 4
    %v1280 = vrot.slane %v929, 6
    %v1281 = vsel %vm1212, %v1279, %v1280
    %v1282 = vrot.slane %v1280, 4
    %v1283 = vrot.slane %v930, 6
    %v1284 = vsel %vm1212, %v1282, %v1283
    %v1285 = vrot.slane %v1283, 4
    %v1286 = vrot.slane %v931, 6
    %v1287 = vsel %vm1212, %v1285, %v1286
    %v1288 = vrot.slane %v1286, 4
    %v1289 = vrot.slane %v932, 6
    %v1290 = vsel %vm1212, %v1288, %v1289
    %v1291 = vrot.slane %v933, 6
    %v1292 = vrot.slane %v1291, 4
    %v1293 = vrot.slane %v934, 6
    %v1294 = vsel %vm1212, %v1292, %v1293
    %v1295 = vrot.slane %v1293, 4
    %v1296 = vrot.slane %v935, 6
    %v1297 = vsel %vm1212, %v1295, %v1296
    %v1298 = vrot.slane %v1296, 4
    %v1299 = vrot.slane %v936, 6
    %v1300 = vsel %vm1212, %v1298, %v1299
    %v1301 = vrot.slane %v1299, 4
    %v1302 = vrot.slane %v937, 6
    %v1303 = vsel %vm1212, %v1301, %v1302
    %v1304 = vrot.slane %v938, 6
    %v1305 = vrot.slane %v1304, 4
    %v1306 = vrot.slane %v939, 6
    %v1307 = vsel %vm1212, %v1305, %v1306
    %v1308 = vrot.slane %v1306, 4
    %v1309 = vrot.slane %v940, 6
    %v1310 = vsel %vm1212, %v1308, %v1309
    %v1311 = vrot.slane %v1309, 4
    %v1312 = vrot.slane %v941, 6
    %v1313 = vsel %vm1212, %v1311, %v1312
    %v1314 = vrot.slane %v1312, 4
    %v1315 = vrot.slane %v942, 6
    %v1316 = vsel %vm1212, %v1314, %v1315
    %1317 = vrot.lane.b32.xlu0 %v1216, 64
    %v1318 = vpop.permute.xlu0 %1317
    %1319 = vrot.lane.b32.xlu0 %v1219, 64
    %v1320 = vpop.permute.xlu0 %1319
    %1321 = vrot.lane.b32.xlu0 %v1222, 64
    %v1322 = vpop.permute.xlu0 %1321
    %1323 = vrot.lane.b32.xlu0 %v1225, 64
    %v1324 = vpop.permute.xlu0 %1323
    %1325 = vrot.lane.b32.xlu0 %v1229, 64
    %v1326 = vpop.permute.xlu0 %1325
    %1327 = vrot.lane.b32.xlu0 %v1232, 64
    %v1328 = vpop.permute.xlu0 %1327
    %1329 = vrot.lane.b32.xlu0 %v1235, 64
    %v1330 = vpop.permute.xlu0 %1329
    %1331 = vrot.lane.b32.xlu0 %v1238, 64
    %v1332 = vpop.permute.xlu0 %1331
    %1333 = vrot.lane.b32.xlu0 %v1242, 64
    %v1334 = vpop.permute.xlu0 %1333
    %1335 = vrot.lane.b32.xlu0 %v1245, 64
    %v1336 = vpop.permute.xlu0 %1335
    %1337 = vrot.lane.b32.xlu0 %v1248, 64
    %v1338 = vpop.permute.xlu0 %1337
    %1339 = vrot.lane.b32.xlu0 %v1251, 64
    %v1340 = vpop.permute.xlu0 %1339
    %1341 = vrot.lane.b32.xlu0 %v1255, 64
    %v1342 = vpop.permute.xlu0 %1341
    %1343 = vrot.lane.b32.xlu0 %v1258, 64
    %v1344 = vpop.permute.xlu0 %1343
    %1345 = vrot.lane.b32.xlu0 %v1261, 64
    %v1346 = vpop.permute.xlu0 %1345
    %1347 = vrot.lane.b32.xlu0 %v1264, 64
    %v1348 = vpop.permute.xlu0 %1347
    %1349 = vrot.lane.b32.xlu0 %v1268, 64
    %v1350 = vpop.permute.xlu0 %1349
    %1351 = vrot.lane.b32.xlu0 %v1271, 64
    %v1352 = vpop.permute.xlu0 %1351
    %1353 = vrot.lane.b32.xlu0 %v1274, 64
    %v1354 = vpop.permute.xlu0 %1353
    %1355 = vrot.lane.b32.xlu0 %v1277, 64
    %v1356 = vpop.permute.xlu0 %1355
    %1357 = vrot.lane.b32.xlu0 %v1281, 64
    %v1358 = vpop.permute.xlu0 %1357
    %1359 = vrot.lane.b32.xlu0 %v1284, 64
    %v1360 = vpop.permute.xlu0 %1359
    %1361 = vrot.lane.b32.xlu0 %v1287, 64
    %v1362 = vpop.permute.xlu0 %1361
    %1363 = vrot.lane.b32.xlu0 %v1290, 64
    %v1364 = vpop.permute.xlu0 %1363
    %1365 = vrot.lane.b32.xlu0 %v1294, 64
    %v1366 = vpop.permute.xlu0 %1365
    %1367 = vrot.lane.b32.xlu0 %v1297, 64
    %v1368 = vpop.permute.xlu0 %1367
    %1369 = vrot.lane.b32.xlu0 %v1300, 64
    %v1370 = vpop.permute.xlu0 %1369
    %1371 = vrot.lane.b32.xlu0 %v1303, 64
    %v1372 = vpop.permute.xlu0 %1371
    %1373 = vrot.lane.b32.xlu0 %v1307, 64
    %v1374 = vpop.permute.xlu0 %1373
    %1375 = vrot.lane.b32.xlu0 %v1310, 64
    %v1376 = vpop.permute.xlu0 %1375
    %1377 = vrot.lane.b32.xlu0 %v1313, 64
    %v1378 = vpop.permute.xlu0 %1377
    %1379 = vrot.lane.b32.xlu0 %v1316, 64
    %v1380 = vpop.permute.xlu0 %1379
    %v1413 = vadd.f32 %v1178, %v1318
    %v1414 = vadd.f32 %v1179, %v1320
    %v1415 = vadd.f32 %v1180, %v1322
    %v1416 = vadd.f32 %v1181, %v1324
    %v1417 = vadd.f32 %v1182, %v1326
    %v1418 = vadd.f32 %v1183, %v1328
    %v1419 = vadd.f32 %v1184, %v1330
    %v1420 = vadd.f32 %v1185, %v1332
    %v1421 = vadd.f32 %v1186, %v1334
    %v1422 = vadd.f32 %v1187, %v1336
    %v1423 = vadd.f32 %v1188, %v1338
    %v1424 = vadd.f32 %v1189, %v1340
    %v1425 = vadd.f32 %v1190, %v1342
    %v1426 = vadd.f32 %v1191, %v1344
    %v1427 = vadd.f32 %v1192, %v1346
    %v1428 = vadd.f32 %v1193, %v1348
    %v1429 = vadd.f32 %v1194, %v1350
    %v1430 = vadd.f32 %v1195, %v1352
    %v1431 = vadd.f32 %v1196, %v1354
    %v1432 = vadd.f32 %v1197, %v1356
    %v1433 = vadd.f32 %v1198, %v1358
    %v1434 = vadd.f32 %v1199, %v1360
    %v1435 = vadd.f32 %v1200, %v1362
    %v1436 = vadd.f32 %v1201, %v1364
    %v1437 = vadd.f32 %v1202, %v1366
    %v1438 = vadd.f32 %v1203, %v1368
    %v1439 = vadd.f32 %v1204, %v1370
    %v1440 = vadd.f32 %v1205, %v1372
    %v1441 = vadd.f32 %v1206, %v1374
    %v1442 = vadd.f32 %v1207, %v1376
    %v1443 = vadd.f32 %v1208, %v1378
    %v1444 = vadd.f32 %v1209, %v1380
    %vm1445 = vcmask 1044484
    %vm1446 = vmor %vm723, %vm1445
    %v1447 = vrot.slane %v903, 7
    %v1448 = vrot.slane %v1447, 4
    %v1449 = vrot.slane %v904, 7
    %v1450 = vsel %vm1446, %v1448, %v1449
    %v1451 = vrot.slane %v1449, 4
    %v1452 = vrot.slane %v905, 7
    %v1453 = vsel %vm1446, %v1451, %v1452
    %v1454 = vrot.slane %v1452, 4
    %v1455 = vrot.slane %v906, 7
    %v1456 = vsel %vm1446, %v1454, %v1455
    %v1457 = vrot.slane %v1455, 4
    %v1458 = vrot.slane %v907, 7
    %v1459 = vsel %vm1446, %v1457, %v1458
    %v1460 = vrot.slane %v908, 7
    %v1461 = vrot.slane %v1460, 4
    %v1462 = vrot.slane %v909, 7
    %v1463 = vsel %vm1446, %v1461, %v1462
    %v1464 = vrot.slane %v1462, 4
    %v1465 = vrot.slane %v910, 7
    %v1466 = vsel %vm1446, %v1464, %v1465
    %v1467 = vrot.slane %v1465, 4
    %v1468 = vrot.slane %v911, 7
    %v1469 = vsel %vm1446, %v1467, %v1468
    %v1470 = vrot.slane %v1468, 4
    %v1471 = vrot.slane %v912, 7
    %v1472 = vsel %vm1446, %v1470, %v1471
    %v1473 = vrot.slane %v913, 7
    %v1474 = vrot.slane %v1473, 4
    %v1475 = vrot.slane %v914, 7
    %v1476 = vsel %vm1446, %v1474, %v1475
    %v1477 = vrot.slane %v1475, 4
    %v1478 = vrot.slane %v915, 7
    %v1479 = vsel %vm1446, %v1477, %v1478
    %v1480 = vrot.slane %v1478, 4
    %v1481 = vrot.slane %v916, 7
    %v1482 = vsel %vm1446, %v1480, %v1481
    %v1483 = vrot.slane %v1481, 4
    %v1484 = vrot.slane %v917, 7
    %v1485 = vsel %vm1446, %v1483, %v1484
    %v1486 = vrot.slane %v918, 7
    %v1487 = vrot.slane %v1486, 4
    %v1488 = vrot.slane %v919, 7
    %v1489 = vsel %vm1446, %v1487, %v1488
    %v1490 = vrot.slane %v1488, 4
    %v1491 = vrot.slane %v920, 7
    %v1492 = vsel %vm1446, %v1490, %v1491
    %v1493 = vrot.slane %v1491, 4
    %v1494 = vrot.slane %v921, 7
    %v1495 = vsel %vm1446, %v1493, %v1494
    %v1496 = vrot.slane %v1494, 4
    %v1497 = vrot.slane %v922, 7
    %v1498 = vsel %vm1446, %v1496, %v1497
    %v1499 = vrot.slane %v923, 7
    %v1500 = vrot.slane %v1499, 4
    %v1501 = vrot.slane %v924, 7
    %v1502 = vsel %vm1446, %v1500, %v1501
    %v1503 = vrot.slane %v1501, 4
    %v1504 = vrot.slane %v925, 7
    %v1505 = vsel %vm1446, %v1503, %v1504
    %v1506 = vrot.slane %v1504, 4
    %v1507 = vrot.slane %v926, 7
    %v1508 = vsel %vm1446, %v1506, %v1507
    %v1509 = vrot.slane %v1507, 4
    %v1510 = vrot.slane %v927, 7
    %v1511 = vsel %vm1446, %v1509, %v1510
    %v1512 = vrot.slane %v928, 7
    %v1513 = vrot.slane %v1512, 4
    %v1514 = vrot.slane %v929, 7
    %v1515 = vsel %vm1446, %v1513, %v1514
    %v1516 = vrot.slane %v1514, 4
    %v1517 = vrot.slane %v930, 7
    %v1518 = vsel %vm1446, %v1516, %v1517
    %v1519 = vrot.slane %v1517, 4
    %v1520 = vrot.slane %v931, 7
    %v1521 = vsel %vm1446, %v1519, %v1520
    %v1522 = vrot.slane %v1520, 4
    %v1523 = vrot.slane %v932, 7
    %v1524 = vsel %vm1446, %v1522, %v1523
    %v1525 = vrot.slane %v933, 7
    %v1526 = vrot.slane %v1525, 4
    %v1527 = vrot.slane %v934, 7
    %v1528 = vsel %vm1446, %v1526, %v1527
    %v1529 = vrot.slane %v1527, 4
    %v1530 = vrot.slane %v935, 7
    %v1531 = vsel %vm1446, %v1529, %v1530
    %v1532 = vrot.slane %v1530, 4
    %v1533 = vrot.slane %v936, 7
    %v1534 = vsel %vm1446, %v1532, %v1533
    %v1535 = vrot.slane %v1533, 4
    %v1536 = vrot.slane %v937, 7
    %v1537 = vsel %vm1446, %v1535, %v1536
    %v1538 = vrot.slane %v938, 7
    %v1539 = vrot.slane %v1538, 4
    %v1540 = vrot.slane %v939, 7
    %v1541 = vsel %vm1446, %v1539, %v1540
    %v1542 = vrot.slane %v1540, 4
    %v1543 = vrot.slane %v940, 7
    %v1544 = vsel %vm1446, %v1542, %v1543
    %v1545 = vrot.slane %v1543, 4
    %v1546 = vrot.slane %v941, 7
    %v1547 = vsel %vm1446, %v1545, %v1546
    %v1548 = vrot.slane %v1546, 4
    %v1549 = vrot.slane %v942, 7
    %v1550 = vsel %vm1446, %v1548, %v1549
    %1551 = vrot.lane.b32.xlu0 %v1450, 32
    %v1552 = vpop.permute.xlu0 %1551
    %1553 = vrot.lane.b32.xlu0 %v1453, 32
    %v1554 = vpop.permute.xlu0 %1553
    %1555 = vrot.lane.b32.xlu0 %v1456, 32
    %v1556 = vpop.permute.xlu0 %1555
    %1557 = vrot.lane.b32.xlu0 %v1459, 32
    %v1558 = vpop.permute.xlu0 %1557
    %1559 = vrot.lane.b32.xlu0 %v1463, 32
    %v1560 = vpop.permute.xlu0 %1559
    %1561 = vrot.lane.b32.xlu0 %v1466, 32
    %v1562 = vpop.permute.xlu0 %1561
    %1563 = vrot.lane.b32.xlu0 %v1469, 32
    %v1564 = vpop.permute.xlu0 %1563
    %1565 = vrot.lane.b32.xlu0 %v1472, 32
    %v1566 = vpop.permute.xlu0 %1565
    %1567 = vrot.lane.b32.xlu0 %v1476, 32
    %v1568 = vpop.permute.xlu0 %1567
    %1569 = vrot.lane.b32.xlu0 %v1479, 32
    %v1570 = vpop.permute.xlu0 %1569
    %1571 = vrot.lane.b32.xlu0 %v1482, 32
    %v1572 = vpop.permute.xlu0 %1571
    %1573 = vrot.lane.b32.xlu0 %v1485, 32
    %v1574 = vpop.permute.xlu0 %1573
    %1575 = vrot.lane.b32.xlu0 %v1489, 32
    %v1576 = vpop.permute.xlu0 %1575
    %1577 = vrot.lane.b32.xlu0 %v1492, 32
    %v1578 = vpop.permute.xlu0 %1577
    %1579 = vrot.lane.b32.xlu0 %v1495, 32
    %v1580 = vpop.permute.xlu0 %1579
    %1581 = vrot.lane.b32.xlu0 %v1498, 32
    %v1582 = vpop.permute.xlu0 %1581
    %1583 = vrot.lane.b32.xlu0 %v1502, 32
    %v1584 = vpop.permute.xlu0 %1583
    %1585 = vrot.lane.b32.xlu0 %v1505, 32
    %v1586 = vpop.permute.xlu0 %1585
    %1587 = vrot.lane.b32.xlu0 %v1508, 32
    %v1588 = vpop.permute.xlu0 %1587
    %1589 = vrot.lane.b32.xlu0 %v1511, 32
    %v1590 = vpop.permute.xlu0 %1589
    %1591 = vrot.lane.b32.xlu0 %v1515, 32
    %v1592 = vpop.permute.xlu0 %1591
    %1593 = vrot.lane.b32.xlu0 %v1518, 32
    %v1594 = vpop.permute.xlu0 %1593
    %1595 = vrot.lane.b32.xlu0 %v1521, 32
    %v1596 = vpop.permute.xlu0 %1595
    %1597 = vrot.lane.b32.xlu0 %v1524, 32
    %v1598 = vpop.permute.xlu0 %1597
    %1599 = vrot.lane.b32.xlu0 %v1528, 32
    %v1600 = vpop.permute.xlu0 %1599
    %1601 = vrot.lane.b32.xlu0 %v1531, 32
    %v1602 = vpop.permute.xlu0 %1601
    %1603 = vrot.lane.b32.xlu0 %v1534, 32
    %v1604 = vpop.permute.xlu0 %1603
    %1605 = vrot.lane.b32.xlu0 %v1537, 32
    %v1606 = vpop.permute.xlu0 %1605
    %1607 = vrot.lane.b32.xlu0 %v1541, 32
    %v1608 = vpop.permute.xlu0 %1607
    %1609 = vrot.lane.b32.xlu0 %v1544, 32
    %v1610 = vpop.permute.xlu0 %1609
    %1611 = vrot.lane.b32.xlu0 %v1547, 32
    %v1612 = vpop.permute.xlu0 %1611
    %1613 = vrot.lane.b32.xlu0 %v1550, 32
    %v1614 = vpop.permute.xlu0 %1613
    %v1647 = vadd.f32 %v1413, %v1552
    %v1648 = vadd.f32 %v1414, %v1554
    %v1649 = vadd.f32 %v1415, %v1556
    %v1650 = vadd.f32 %v1416, %v1558
    %v1651 = vadd.f32 %v1417, %v1560
    %v1652 = vadd.f32 %v1418, %v1562
    %v1653 = vadd.f32 %v1419, %v1564
    %v1654 = vadd.f32 %v1420, %v1566
    %v1655 = vadd.f32 %v1421, %v1568
    %v1656 = vadd.f32 %v1422, %v1570
    %v1657 = vadd.f32 %v1423, %v1572
    %v1658 = vadd.f32 %v1424, %v1574
    %v1659 = vadd.f32 %v1425, %v1576
    %v1660 = vadd.f32 %v1426, %v1578
    %v1661 = vadd.f32 %v1427, %v1580
    %v1662 = vadd.f32 %v1428, %v1582
    %v1663 = vadd.f32 %v1429, %v1584
    %v1664 = vadd.f32 %v1430, %v1586
    %v1665 = vadd.f32 %v1431, %v1588
    %v1666 = vadd.f32 %v1432, %v1590
    %v1667 = vadd.f32 %v1433, %v1592
    %v1668 = vadd.f32 %v1434, %v1594
    %v1669 = vadd.f32 %v1435, %v1596
    %v1670 = vadd.f32 %v1436, %v1598
    %v1671 = vadd.f32 %v1437, %v1600
    %v1672 = vadd.f32 %v1438, %v1602
    %v1673 = vadd.f32 %v1439, %v1604
    %v1674 = vadd.f32 %v1440, %v1606
    %v1675 = vadd.f32 %v1441, %v1608
    %v1676 = vadd.f32 %v1442, %v1610
    %v1677 = vadd.f32 %v1443, %v1612
    %v1678 = vadd.f32 %v1444, %v1614
    %v1679 = vrot.slane %v904, 4
    %v1680 = vrot.slane %v905, 4
    %v1681 = vrot.slane %v906, 4
    %v1682 = vrot.slane %v907, 4
    %v1683 = vrot.slane %v909, 4
    %v1684 = vrot.slane %v910, 4
    %v1685 = vrot.slane %v911, 4
    %v1686 = vrot.slane %v912, 4
    %v1687 = vrot.slane %v914, 4
    %v1688 = vrot.slane %v915, 4
    %v1689 = vrot.slane %v916, 4
    %v1690 = vrot.slane %v917, 4
    %v1691 = vrot.slane %v919, 4
    %v1692 = vrot.slane %v920, 4
    %v1693 = vrot.slane %v921, 4
    %v1694 = vrot.slane %v922, 4
    %v1695 = vrot.slane %v924, 4
    %v1696 = vrot.slane %v925, 4
    %v1697 = vrot.slane %v926, 4
    %v1698 = vrot.slane %v927, 4
    %v1699 = vrot.slane %v929, 4
    %v1700 = vrot.slane %v930, 4
    %v1701 = vrot.slane %v931, 4
    %v1702 = vrot.slane %v932, 4
    %v1703 = vrot.slane %v934, 4
    %v1704 = vrot.slane %v935, 4
    %v1705 = vrot.slane %v936, 4
    %v1706 = vrot.slane %v937, 4
    %v1707 = vrot.slane %v939, 4
    %v1708 = vrot.slane %v940, 4
    %v1709 = vrot.slane %v941, 4
    %v1710 = vrot.slane %v942, 4
    %v1743 = vadd.f32 %v1647, %v1679
    %v1744 = vadd.f32 %v1648, %v1680
    %v1745 = vadd.f32 %v1649, %v1681
    %v1746 = vadd.f32 %v1650, %v1682
    %v1747 = vadd.f32 %v1651, %v1683
    %v1748 = vadd.f32 %v1652, %v1684
    %v1749 = vadd.f32 %v1653, %v1685
    %v1750 = vadd.f32 %v1654, %v1686
    %v1751 = vadd.f32 %v1655, %v1687
    %v1752 = vadd.f32 %v1656, %v1688
    %v1753 = vadd.f32 %v1657, %v1689
    %v1754 = vadd.f32 %v1658, %v1690
    %v1755 = vadd.f32 %v1659, %v1691
    %v1756 = vadd.f32 %v1660, %v1692
    %v1757 = vadd.f32 %v1661, %v1693
    %v1758 = vadd.f32 %v1662, %v1694
    %v1759 = vadd.f32 %v1663, %v1695
    %v1760 = vadd.f32 %v1664, %v1696
    %v1761 = vadd.f32 %v1665, %v1697
    %v1762 = vadd.f32 %v1666, %v1698
    %v1763 = vadd.f32 %v1667, %v1699
    %v1764 = vadd.f32 %v1668, %v1700
    %v1765 = vadd.f32 %v1669, %v1701
    %v1766 = vadd.f32 %v1670, %v1702
    %v1767 = vadd.f32 %v1671, %v1703
    %v1768 = vadd.f32 %v1672, %v1704
    %v1769 = vadd.f32 %v1673, %v1705
    %v1770 = vadd.f32 %v1674, %v1706
    %v1771 = vadd.f32 %v1675, %v1707
    %v1772 = vadd.f32 %v1676, %v1708
    %v1773 = vadd.f32 %v1677, %v1709
    %v1774 = vadd.f32 %v1678, %v1710
    %v1807 = vcombine.low %v1743, %v1744
    %v1808 = vcombine.low %v1745, %v1746
    %v1809 = vcombine.low %v1747, %v1748
    %v1810 = vcombine.low %v1749, %v1750
    %v1811 = vcombine.low %v1751, %v1752
    %v1812 = vcombine.low %v1753, %v1754
    %v1813 = vcombine.low %v1755, %v1756
    %v1814 = vcombine.low %v1757, %v1758
    %v1815 = vcombine.low %v1759, %v1760
    %v1816 = vcombine.low %v1761, %v1762
    %v1817 = vcombine.low %v1763, %v1764
    %v1818 = vcombine.low %v1765, %v1766
    %v1819 = vcombine.low %v1767, %v1768
    %v1820 = vcombine.low %v1769, %v1770
    %v1821 = vcombine.low %v1771, %v1772
    %v1822 = vcombine.low %v1773, %v1774
    %vm1839 = vcmask 261120
    %v1840 = vsel %vm1839, %v1807, -inf
    %v1841 = vsel %vm1839, %v1808, -inf
    %v1842 = vmax.f32 %v1840, %v1841
    %v1843 = vrot.slane %v1842, 4
    %v1844 = vmax.f32 %v1842, %v1843
    %v1845 = vrot.slane %v1844, 2
    %v1846 = vmax.f32 %v1844, %v1845
    %v1847 = vrot.slane %v1846, 1
    %v1848 = vmax.f32 %v1846, %v1847
    %v1849 = vsel %vm1839, %v1809, -inf
    %v1850 = vsel %vm1839, %v1810, -inf
    %v1851 = vmax.f32 %v1849, %v1850
    %v1852 = vrot.slane %v1851, 4
    %v1853 = vmax.f32 %v1851, %v1852
    %v1854 = vrot.slane %v1853, 2
    %v1855 = vmax.f32 %v1853, %v1854
    %v1856 = vrot.slane %v1855, 1
    %v1857 = vmax.f32 %v1855, %v1856
    %v1858 = vsel %vm1839, %v1811, -inf
    %v1859 = vsel %vm1839, %v1812, -inf
    %v1860 = vmax.f32 %v1858, %v1859
    %v1861 = vrot.slane %v1860, 4
    %v1862 = vmax.f32 %v1860, %v1861
    %v1863 = vrot.slane %v1862, 2
    %v1864 = vmax.f32 %v1862, %v1863
    %v1865 = vrot.slane %v1864, 1
    %v1866 = vmax.f32 %v1864, %v1865
    %v1867 = vsel %vm1839, %v1813, -inf
    %v1868 = vsel %vm1839, %v1814, -inf
    %v1869 = vmax.f32 %v1867, %v1868
    %v1870 = vrot.slane %v1869, 4
    %v1871 = vmax.f32 %v1869, %v1870
    %v1872 = vrot.slane %v1871, 2
    %v1873 = vmax.f32 %v1871, %v1872
    %v1874 = vrot.slane %v1873, 1
    %v1875 = vmax.f32 %v1873, %v1874
    %v1876 = vsel %vm1839, %v1815, -inf
    %v1877 = vsel %vm1839, %v1816, -inf
    %v1878 = vmax.f32 %v1876, %v1877
    %v1879 = vrot.slane %v1878, 4
    %v1880 = vmax.f32 %v1878, %v1879
    %v1881 = vrot.slane %v1880, 2
    %v1882 = vmax.f32 %v1880, %v1881
    %v1883 = vrot.slane %v1882, 1
    %v1884 = vmax.f32 %v1882, %v1883
    %v1885 = vsel %vm1839, %v1817, -inf
    %v1886 = vsel %vm1839, %v1818, -inf
    %v1887 = vmax.f32 %v1885, %v1886
    %v1888 = vrot.slane %v1887, 4
    %v1889 = vmax.f32 %v1887, %v1888
    %v1890 = vrot.slane %v1889, 2
    %v1891 = vmax.f32 %v1889, %v1890
    %v1892 = vrot.slane %v1891, 1
    %v1893 = vmax.f32 %v1891, %v1892
    %v1894 = vsel %vm1839, %v1819, -inf
    %v1895 = vsel %vm1839, %v1820, -inf
    %v1896 = vmax.f32 %v1894, %v1895
    %v1897 = vrot.slane %v1896, 4
    %v1898 = vmax.f32 %v1896, %v1897
    %v1899 = vrot.slane %v1898, 2
    %v1900 = vmax.f32 %v1898, %v1899
    %v1901 = vrot.slane %v1900, 1
    %v1902 = vmax.f32 %v1900, %v1901
    %v1903 = vsel %vm1839, %v1821, -inf
    %v1904 = vsel %vm1839, %v1822, -inf
    %v1905 = vmax.f32 %v1903, %v1904
    %v1906 = vrot.slane %v1905, 4
    %v1907 = vmax.f32 %v1905, %v1906
    %v1908 = vrot.slane %v1907, 2
    %v1909 = vmax.f32 %v1907, %v1908
    %v1910 = vrot.slane %v1909, 1
    %v1911 = vmax.f32 %v1909, %v1910
    %v1912 = vld [vmem:[%s2] sm:$0x1]
    %v1914 = vlaneseq
    %v1915 = vshrl.u32 %v1914, 7
    %v1916 = vsub.s32 0, %v1915
    %v1917 = vrot.slane %v1912, %v1916
    %v1919 = vadd.f32 %v1848, %v1917
    %v1920 = vadd.f32 %v1857, %v1917
    %v1921 = vadd.f32 %v1866, %v1917
    %v1922 = vadd.f32 %v1875, %v1917
    %v1923 = vadd.f32 %v1884, %v1917
    %v1924 = vadd.f32 %v1893, %v1917
    %v1925 = vadd.f32 %v1902, %v1917
    %v1926 = vadd.f32 %v1911, %v1917
    %v1927 = vmax.f32 %v1919, 0.0
    %v1928 = vmax.f32 %v1920, 0.0
    %v1929 = vmax.f32 %v1921, 0.0
    %v1930 = vmax.f32 %v1922, 0.0
    %v1931 = vmax.f32 %v1923, 0.0
    %v1932 = vmax.f32 %v1924, 0.0
    %v1933 = vmax.f32 %v1925, 0.0
    %v1934 = vmax.f32 %v1926, 0.0
    %v1935 = vld [vmem:[#allocation7] sm:$0xff]
    %v1936 = vld [vmem:[#allocation7 + $0x8] sm:$0xff]
    %v1937 = vld [vmem:[#allocation7 + $0x10] sm:$0xff]
    %v1938 = vld [vmem:[#allocation7 + $0x18] sm:$0xff]
    %v1939 = vld [vmem:[%s4] sm:$0x1]
    %v1941 = vlaneseq
    %v1942 = vshrl.u32 %v1941, 7
    %v1943 = vsub.s32 0, %v1942
    %v1944 = vrot.slane %v1939, %v1943
    %v1954 = vrot.slane %v1928, 7
    %vm1955 = vcmask 1041409
    %v1956 = vsel %vm1955, %v1954, %v1927
    %v1957 = vrot.slane %v1929, 6
    %vm1958 = vcmask 1042434
    %v1959 = vsel %vm1958, %v1957, %v1956
    %v1960 = vrot.slane %v1930, 5
    %vm1961 = vcmask 1043459
    %v1962 = vsel %vm1961, %v1960, %v1959
    %v1963 = vrot.slane %v1931, 4
    %v1964 = vsel %vm1445, %v1963, %v1962
    %v1965 = vrot.slane %v1932, 3
    %vm1966 = vcmask 1045509
    %v1967 = vsel %vm1966, %v1965, %v1964
    %v1968 = vrot.slane %v1933, 2
    %vm1969 = vcmask 1046534
    %v1970 = vsel %vm1969, %v1968, %v1967
    %v1971 = vrot.slane %v1934, 1
    %vm1972 = vcmask 1047559
    %v1973 = vsel %vm1972, %v1971, %v1970
    %v1974 = vsel %vm1839, %v1973, 0
    %1976 = vmatprep.subr.mxu0 0.0
    %1977 = vmatpush1.msra.mxu0 %v1935
    %1978 = vmatprep.subr.mxu0 0.0
    %1979 = vmatpush1.msra.mxu0 %v1936
    %1980 = vmatprep.subr.mxu0 0.0
    %1981 = vmatpush1.msra.mxu0 %v1937
    %1982 = vmatprep.subr.mxu0 0.0
    %1983 = vmatpush1.msra.mxu0 %v1938
    %1984 = vmatprep.subr.mxu0 0.0
    %1985 = vmatpush1.msra.mxu0 0.0
    %1986 = vmatprep.subr.mxu0 0.0
    %1987 = vmatpush1.msra.mxu0 0.0
    %1988 = vmatprep.subr.mxu0 0.0
    %1989 = vmatpush1.msra.mxu0 0.0
    %1990 = vmatprep.subr.mxu0 0.0
    %1991 = vmatpush1.msra.mxu0 0.0
    %1992 = vmatprep.subr.mxu0 0.0
    %1993 = vmatpush1.msra.mxu0 0.0
    %1994 = vmatprep.subr.mxu0 0.0
    %1995 = vmatpush1.msra.mxu0 0.0
    %1996 = vmatprep.subr.mxu0 0.0
    %1997 = vmatpush1.msra.mxu0 0.0
    %1998 = vmatprep.subr.mxu0 0.0
    %1999 = vmatpush1.msra.mxu0 0.0
    %2000 = vmatprep.subr.mxu0 0.0
    %2001 = vmatpush1.msra.mxu0 0.0
    %2002 = vmatprep.subr.mxu0 0.0
    %2003 = vmatpush1.msra.mxu0 0.0
    %2004 = vmatprep.subr.mxu0 0.0
    %2005 = vmatpush1.msra.mxu0 0.0
    %2006 = vmatprep.subr.mxu0 0.0
    %2007 = vmatpush1.msra.mxu0 0.0
    %2008 = vmatprep.subr.mxu0 0.0
    %2009 = vmatpush1.msra.mxu0 0.0
    %2010 = vmatprep.subr.mxu0 0.0
    %2011 = vmatpush1.msra.mxu0 0.0
    %2012 = vmatprep.subr.mxu0 0.0
    %2013 = vmatpush1.msra.mxu0 0.0
    %2014 = vmatprep.subr.mxu0 0.0
    %2015 = vmatpush1.msra.mxu0 0.0
    %2016 = vmatprep.subr.mxu0 0.0
    %2017 = vmatpush1.msra.mxu0 0.0
    %2018 = vmatprep.subr.mxu0 0.0
    %2019 = vmatpush1.msra.mxu0 0.0
    %2020 = vmatprep.subr.mxu0 0.0
    %2021 = vmatpush1.msra.mxu0 0.0
    %2022 = vmatprep.subr.mxu0 0.0
    %2023 = vmatpush1.msra.mxu0 0.0
    %2024 = vmatprep.subr.mxu0 0.0
    %2025 = vmatpush1.msra.mxu0 0.0
    %2026 = vmatprep.subr.mxu0 0.0
    %2027 = vmatpush1.msra.mxu0 0.0
    %2028 = vmatprep.subr.mxu0 0.0
    %2029 = vmatpush1.msra.mxu0 0.0
    %2030 = vmatprep.subr.mxu0 0.0
    %2031 = vmatpush1.msra.mxu0 0.0
    %2032 = vmatprep.subr.mxu0 0.0
    %2033 = vmatpush1.msra.mxu0 0.0
    %2034 = vmatprep.subr.mxu0 0.0
    %2035 = vmatpush1.msra.mxu0 0.0
    %2036 = vmatprep.subr.mxu0 0.0
    %2037 = vmatpush1.msra.mxu0 0.0
    %2038 = vmatprep.subr.mxu0 0.0
    %2039 = vmatpush1.msra.mxu0 0.0
    %2040 = vmatprep.mubr.f32.mxu0 0.0
    %2041 = vmatmul.mubr.f32.gmra.mrb[0].mxu0 %v1974
    %v2042 = vpop.f32.mrb[0].mxu0
    %v2043 = vadd.f32 %v1944, %v2042
    %v2044 = vpop.f32.mrb[0].mxu0
    %2045 = vdwg.mxu0
    %2046 = vst [vmem:[#allocation8] sm:$0xff] %v2043
    // Predicated region
    $region34: #{tpu_custom_call.1} parent=1 // pred_check
      _
    $region35: #{tpu_custom_call.1} parent=1 // pred_check_branch
      %2048 = sbr.rel (0) target = $region37
    $region36: #{tpu_custom_call.1} parent=1 // pred_region
      %s2050 = ssub.s32 128, 128
      %2051 = vsyncadd [#allocation4], %s2050
      %s2053 = sshll.u32 [#allocation8], 4
      %s2054 = int_to_ptr.vmem [resolvable:$true] %s2053
      %2056 = dma.vmem_to_hbm [thread:$0]  %s2054, 128, %s5, [#allocation4]
    $region37: #{tpu_custom_call.1} parent=1 // pred_fallthru
      _
    // Predicated region
    $region38: #{tpu_custom_call.1} parent=1 // pred_check
      _
    $region39: #{tpu_custom_call.1} parent=1 // pred_check_branch
      %2058 = sbr.rel (0) target = $region41
    $region40: #{tpu_custom_call.1} parent=1 // pred_region
      %2059 = dma.done [#allocation4], 128
    $region41: #{tpu_custom_call.1} parent=1 // pred_fallthru
      _
    %2060 = vsyncpa [#allocation3], 1
    %2061 = vsyncpa [#allocation6], 1
    %2062 = vsyncpa [#allocation4], 1

</llo_original>
